<compile_context>
chip_gen: v5e
topology: v5e:2x2
jax: 0.10.0
libtpu: 0.0.40
codegen_flags: <defaults>
</compile_context>

<pallas_src>
import jax
import jax.numpy as jnp
from jax.experimental import pallas as pl
from jax.experimental.pallas import tpu as pltpu


def _round_up(a, b):
    return (a + b - 1) // b * b


def final_layer_kernel(x_ref, c_ref, w_shift_ref, w_scale_ref, w_lin_ref,
                       b_shift_ref, b_scale1_ref, b_lin_ref, o_ref):
    # --- adaLN_modulation: SiLU(c) @ W_shift / W_scale ("+1" folded into b_scale1)
    # TODO(synk): if c is shared per sample (broadcast over T tokens), precompute
    # shift/scale once per sample outside this kernel and pass them in with a
    # per-sample index_map instead of redoing 4*H^2 FLOPs per token row.
    c = c_ref[...].astype(jnp.float32)
    c_silu = (c * jax.nn.sigmoid(c)).astype(w_shift_ref.dtype)   # sigmoid -> EUP slot
    shift = (jnp.dot(c_silu, w_shift_ref[...], preferred_element_type=jnp.float32)
             + b_shift_ref[...])
    scale1 = (jnp.dot(c_silu, w_scale_ref[...], preferred_element_type=jnp.float32)
              + b_scale1_ref[...])                               # == 1 + scale

    # --- LayerNorm(x), elementwise_affine=False, eps=1e-6 (f32 math) ----------
    # var = E[x^2] - mu^2: one elementwise read of x, two XLU reductions.
    x = x_ref[...].astype(jnp.float32)
    inv_h = 1.0 / x.shape[-1]
    mu = jnp.sum(x, axis=-1, keepdims=True) * inv_h
    ex2 = jnp.sum(x * x, axis=-1, keepdims=True) * inv_h
    var = jnp.maximum(ex2 - mu * mu, 0.0)
    rstd = jax.lax.rsqrt(var + 1e-6)

    # --- modulate: xn * (1 + scale) + shift, emitted in the matmul dtype ------
    y = (((x - mu) * rstd) * scale1 + shift).astype(w_lin_ref.dtype)

    # --- final linear (lane-padded output columns -> unmasked stores) ---------
    out = (jnp.dot(y, w_lin_ref[...], preferred_element_type=jnp.float32)
           + b_lin_ref[...])
    o_ref[...] = out.astype(o_ref.dtype)


def prepare_final_layer_params(w_mod, b_mod, w_lin, b_lin, *, use_bf16_matmul=False):
    """One-time parameter prep (call once; reuse the result every step).

    w_mod: (H, 2H)  adaLN linear weight, (in, out) layout.   b_mod: (2H,) or (1, 2H)
    w_lin: (H, O)   final linear weight, (in, out) layout.   b_lin: (O,)  or (1, O)
    """
    H = w_mod.shape[0]
    O = w_lin.shape[1]
    Op = _round_up(O, 128)

    b_mod = b_mod.reshape(1, 2 * H).astype(jnp.float32)
    b_lin = b_lin.reshape(1, O).astype(jnp.float32)

    w_shift, w_scale = w_mod[:, :H], w_mod[:, H:]
    b_shift = b_mod[:, :H]
    b_scale1 = b_mod[:, H:] + 1.0            # fold modulate's "+1" into the bias

    w_lin_p, b_lin_p = w_lin, b_lin
    if Op != O:                              # lane-pad output columns to 128
        w_lin_p = jnp.pad(w_lin_p, ((0, 0), (0, Op - O)))
        b_lin_p = jnp.pad(b_lin_p, ((0, 0), (0, Op - O)))

    if use_bf16_matmul:                      # accuracy/speed flag: bf16 MXU operands
        w_shift = w_shift.astype(jnp.bfloat16)
        w_scale = w_scale.astype(jnp.bfloat16)
        w_lin_p = w_lin_p.astype(jnp.bfloat16)

    return dict(w_shift=w_shift, w_scale=w_scale, w_lin=w_lin_p,
                b_shift=b_shift, b_scale1=b_scale1, b_lin=b_lin_p,
                hidden_size=H, out_size=O)


# Cache: does this jax build accept pipeline_mode=pl.Buffered(1) on BlockSpec?
_SINGLE_BUFFER_WEIGHTS_OK = [True]


def final_layer_apply(x, c, params, *, tm=256):
    """FinalLayer forward. x, c: (N, H). Returns (N, out_size) in x.dtype."""
    N, H = x.shape
    w_shift, w_scale, w_lin = params["w_shift"], params["w_scale"], params["w_lin"]
    b_shift, b_scale1, b_lin = params["b_shift"], params["b_scale1"], params["b_lin"]
    O = params["out_size"]
    Op = w_lin.shape[1]

    # Row tile: multiple of 8 sublanes; clamp so there are >= 2 row tiles when N
    # allows it (lets the "parallel" axis shard across both v7x TensorCores).
    tm = max(8, min(_round_up(tm, 8), _round_up(pl.cdiv(N, 2), 8)))

    wdt = w_shift.dtype.itemsize
    ldt = w_lin.dtype.itemsize
    adt = x.dtype.itemsize

    def vmem_bytes(tm_):
        # weights/biases: single-buffered (pl.Buffered(1), constant index_map)
        wbytes = 2 * H * H * wdt + H * Op * ldt + (2 * H + Op) * 4
        # x/c/out tiles: double-buffered by the pipeline
        abytes = 2 * (2 * tm_ * H * adt + tm_ * Op * adt)
        # in-kernel f32 temporaries (x, shift, scale1, y, out, ...)
        sbytes = 6 * tm_ * H * 4 + 2 * tm_ * Op * 4
        return wbytes + abytes + sbytes

    try:
        vmem_cap = pltpu.get_tpu_info().vmem_capacity_bytes
    except Exception:
        vmem_cap = 64 << 20
    budget = int(0.8 * vmem_cap)
    while tm > 8 and vmem_bytes(tm) > budget:
        tm = max(8, _round_up(tm // 2, 8))
    vmem_limit = int(min(max(1.5 * vmem_bytes(tm), 32 << 20), 0.9 * vmem_cap))

    grid = (pl.cdiv(N, tm),)   # ragged tail block is masked by Pallas; no x/c padding

    # TODO(synk): for H >= 2048 f32 add a K-tiling grid axis ("arbitrary", last)
    # with f32 VMEM accumulators so resident weights fit v7x's 64 MiB VMEM.

    def run(single_buffer_weights):
        def row_spec(last):
            return pl.BlockSpec((tm, last), lambda i: (i, 0))

        def resident_spec(shape):
            if single_buffer_weights:
                # Constant block -> fetched once; single-buffered to halve VMEM use.
                return pl.BlockSpec(shape, lambda i: (0, 0),
                                    pipeline_mode=pl.Buffered(1))
            return pl.BlockSpec(shape, lambda i: (0, 0))

        return pl.pallas_call(
            final_layer_kernel,
            out_shape=jax.ShapeDtypeStruct((N, Op), x.dtype),
            grid=grid,
            in_specs=[
                row_spec(H),                 # x tile
                row_spec(H),                 # c tile
                resident_spec((H, H)),       # W_shift
                resident_spec((H, H)),       # W_scale
                resident_spec((H, Op)),      # W_lin (lane-padded)
                resident_spec((1, H)),       # b_shift (f32)
                resident_spec((1, H)),       # b_scale + 1 (f32)
                resident_spec((1, Op)),      # b_lin (lane-padded, f32)
            ],
            out_specs=row_spec(Op),
            compiler_params=pltpu.CompilerParams(
                dimension_semantics=("parallel",),
                vmem_limit_bytes=vmem_limit),
        )(x, c, w_shift, w_scale, w_lin, b_shift, b_scale1, b_lin)

    if _SINGLE_BUFFER_WEIGHTS_OK[0]:
        try:
            out = run(True)
        except Exception:
            _SINGLE_BUFFER_WEIGHTS_OK[0] = False
            out = run(False)
    else:
        out = run(False)

    return out if Op == O else out[:, :O]


def final_layer(x, c, w_mod, b_mod, w_lin, b_lin, *, tm=256, use_bf16_matmul=False):
    """Convenience wrapper: prep params + apply (prefer calling prep once yourself)."""
    params = prepare_final_layer_params(w_mod, b_mod, w_lin, b_lin,
                                        use_bf16_matmul=use_bf16_matmul)
    return final_layer_apply(x, c, params, tm=tm)


def final_layer_ref(x, c, w_mod, b_mod, w_lin, b_lin):
    """Pure-JAX reference matching the PyTorch forward (f32 math)."""
    H = x.shape[1]
    c32 = c.astype(jnp.float32)
    mod = (c32 * jax.nn.sigmoid(c32)) @ w_mod.astype(jnp.float32) + b_mod.astype(jnp.float32)
    shift, scale = mod[:, :H], mod[:, H:]
    x32 = x.astype(jnp.float32)
    mu = jnp.mean(x32, axis=-1, keepdims=True)
    var = jnp.mean((x32 - mu) ** 2, axis=-1, keepdims=True)
    xn = (x32 - mu) * jax.lax.rsqrt(var + 1e-6)
    y = xn * (1.0 + scale) + shift
    return (y @ w_lin.astype(jnp.float32) + b_lin.astype(jnp.float32)).astype(x.dtype)


if __name__ == "__main__":
    N, H, O = 20, 32, 16   # rows (batch*tokens), hidden_size, out_size (small smoke shapes)

    key = jax.random.PRNGKey(0)
    kx, kc, k1, k2, k3, k4 = jax.random.split(key, 6)

    x = jax.random.normal(kx, (N, H), dtype=jnp.float32)
    c = jax.random.normal(kc, (N, H), dtype=jnp.float32)

    # Deterministic synthetic parameters (PyTorch weights transposed to (in, out)).
    w_mod = jax.random.normal(k1, (H, 2 * H), dtype=jnp.float32) * (1.0 / jnp.sqrt(H))
    b_mod = jax.random.normal(k2, (1, 2 * H), dtype=jnp.float32) * 0.02
    w_lin = jax.random.normal(k3, (H, O), dtype=jnp.float32) * (1.0 / jnp.sqrt(H))
    b_lin = jax.random.normal(k4, (1, O), dtype=jnp.float32) * 0.02

    ref = final_layer_ref(x, c, w_mod, b_mod, w_lin, b_lin)

    # f32 path; params prepared once and reused (default tm -> 2 row tiles here).
    params = prepare_final_layer_params(w_mod, b_mod, w_lin, b_lin)
    out = jax.block_until_ready(final_layer_apply(x, c, params))
    assert out.shape == (N, O)
    assert jnp.allclose(out, ref, atol=1e-3, rtol=1e-3), "f32 mismatch vs reference"

    # f32 path, tm=8 -> 3-tile grid with a ragged tail (exercises tail masking).
    out_t = jax.block_until_ready(final_layer_apply(x, c, params, tm=8))
    assert jnp.allclose(out_t, ref, atol=1e-3, rtol=1e-3), "tiled mismatch vs reference"

    # f32 inputs with bf16 matmul operands (accuracy flag) -> fast MXU path.
    out_fast = jax.block_until_ready(
        final_layer(x, c, w_mod, b_mod, w_lin, b_lin, use_bf16_matmul=True))
    assert jnp.allclose(out_fast, ref, atol=1e-1, rtol=1e-1), \
        "bf16-matmul mismatch vs reference"

    # All-bf16 weights/activations, f32 accumulation in the kernel.
    bf = jnp.bfloat16
    out_bf = jax.block_until_ready(
        final_layer(x.astype(bf), c.astype(bf), w_mod.astype(bf), b_mod.astype(bf),
                    w_lin.astype(bf), b_lin.astype(bf)))
    assert out_bf.shape == (N, O)
    assert jnp.allclose(out_bf.astype(jnp.float32), ref, atol=1e-1, rtol=1e-1), \
        "bf16 mismatch vs reference"

    print("KERNEL_OK")
</pallas_src>

<mosaic_0001>
module attributes {stable_mosaic.version = 11 : i64} {
  func.func @final_layer_kernel(%arg0: i32, %arg1: memref<16x32xf32, #tpu.memory_space<vmem>>, %arg2: memref<16x32xf32, #tpu.memory_space<vmem>>, %arg3: memref<32x32xf32, #tpu.memory_space<vmem>>, %arg4: memref<32x32xf32, #tpu.memory_space<vmem>>, %arg5: memref<32x128xf32, #tpu.memory_space<vmem>>, %arg6: memref<1x32xf32, #tpu.memory_space<vmem>>, %arg7: memref<1x32xf32, #tpu.memory_space<vmem>>, %arg8: memref<1x128xf32, #tpu.memory_space<vmem>>, %arg9: memref<16x128xf32, #tpu.memory_space<vmem>>) attributes {dimension_semantics = [#tpu.dimension_semantics<parallel>], iteration_bounds = array<i64: 2>, scalar_prefetch = 0 : i64, scratch_operands = 0 : i64, tpu.core_type = #tpu.core_type<tc>, window_params = [{transform_indices = @transform_0, window_bounds = array<i64: 16, 32>}, {transform_indices = @transform_1, window_bounds = array<i64: 16, 32>}, {pipeline_mode = #tpu.pipeline_mode<synchronous>, transform_indices = @transform_2, window_bounds = array<i64: 32, 32>}, {pipeline_mode = #tpu.pipeline_mode<synchronous>, transform_indices = @transform_3, window_bounds = array<i64: 32, 32>}, {pipeline_mode = #tpu.pipeline_mode<synchronous>, transform_indices = @transform_4, window_bounds = array<i64: 32, 128>}, {pipeline_mode = #tpu.pipeline_mode<synchronous>, transform_indices = @transform_5, window_bounds = array<i64: 1, 32>}, {pipeline_mode = #tpu.pipeline_mode<synchronous>, transform_indices = @transform_6, window_bounds = array<i64: 1, 32>}, {pipeline_mode = #tpu.pipeline_mode<synchronous>, transform_indices = @transform_7, window_bounds = array<i64: 1, 128>}, {transform_indices = @transform_8, window_bounds = array<i64: 16, 128>}]} {
    %c0 = arith.constant 0 : index
    %c0_0 = arith.constant 0 : index
    %0 = vector.load %arg2[%c0, %c0_0] : memref<16x32xf32, #tpu.memory_space<vmem>>, vector<16x32xf32>
    %1 = arith.negf %0 : vector<16x32xf32>
    %2 = math.exp %1 : vector<16x32xf32>
    %cst = arith.constant 1.000000e+00 : f32
    %3 = vector.broadcast %cst : f32 to vector<16x32xf32>
    %4 = arith.addf %3, %2 : vector<16x32xf32>
    %5 = arith.divf %3, %4 : vector<16x32xf32>
    %6 = arith.mulf %0, %5 : vector<16x32xf32>
    %c0_1 = arith.constant 0 : index
    %c0_2 = arith.constant 0 : index
    %7 = vector.load %arg3[%c0_1, %c0_2] : memref<32x32xf32, #tpu.memory_space<vmem>>, vector<32x32xf32>
    %cst_3 = arith.constant dense<0.000000e+00> : vector<16x32xf32>
    %8 = tpu.matmul %6, %7, %cst_3 {dimension_numbers = #tpu.dot_dimension_numbers<[1], [0], [0], [1], [0, 0, 1, 1], [], []>} : vector<16x32xf32>, vector<32x32xf32>, vector<16x32xf32> -> vector<16x32xf32>
    %c0_4 = arith.constant 0 : index
    %c0_5 = arith.constant 0 : index
    %9 = vector.load %arg6[%c0_4, %c0_5] : memref<1x32xf32, #tpu.memory_space<vmem>>, vector<1x32xf32>
    %10 = vector.broadcast %9 : vector<1x32xf32> to vector<16x32xf32>
    %11 = arith.addf %8, %10 : vector<16x32xf32>
    %c0_6 = arith.constant 0 : index
    %c0_7 = arith.constant 0 : index
    %12 = vector.load %arg4[%c0_6, %c0_7] : memref<32x32xf32, #tpu.memory_space<vmem>>, vector<32x32xf32>
    %cst_8 = arith.constant dense<0.000000e+00> : vector<16x32xf32>
    %13 = tpu.matmul %6, %12, %cst_8 {dimension_numbers = #tpu.dot_dimension_numbers<[1], [0], [0], [1], [0, 0, 1, 1], [], []>} : vector<16x32xf32>, vector<32x32xf32>, vector<16x32xf32> -> vector<16x32xf32>
    %c0_9 = arith.constant 0 : index
    %c0_10 = arith.constant 0 : index
    %14 = vector.load %arg7[%c0_9, %c0_10] : memref<1x32xf32, #tpu.memory_space<vmem>>, vector<1x32xf32>
    %15 = vector.broadcast %14 : vector<1x32xf32> to vector<16x32xf32>
    %16 = arith.addf %13, %15 : vector<16x32xf32>
    %c0_11 = arith.constant 0 : index
    %c0_12 = arith.constant 0 : index
    %17 = vector.load %arg1[%c0_11, %c0_12] : memref<16x32xf32, #tpu.memory_space<vmem>>, vector<16x32xf32>
    %cst_13 = arith.constant dense<0.000000e+00> : vector<16xf32>
    %18 = vector.multi_reduction <add>, %17, %cst_13 [1] : vector<16x32xf32> to vector<16xf32>
    %19 = vector.shape_cast %18 : vector<16xf32> to vector<16x1xf32>
    %cst_14 = arith.constant 3.125000e-02 : f32
    %20 = vector.broadcast %cst_14 : f32 to vector<16x1xf32>
    %21 = arith.mulf %19, %20 : vector<16x1xf32>
    %22 = arith.mulf %17, %17 : vector<16x32xf32>
    %cst_15 = arith.constant dense<0.000000e+00> : vector<16xf32>
    %23 = vector.multi_reduction <add>, %22, %cst_15 [1] : vector<16x32xf32> to vector<16xf32>
    %24 = vector.shape_cast %23 : vector<16xf32> to vector<16x1xf32>
    %cst_16 = arith.constant 3.125000e-02 : f32
    %25 = vector.broadcast %cst_16 : f32 to vector<16x1xf32>
    %26 = arith.mulf %24, %25 : vector<16x1xf32>
    %27 = arith.mulf %21, %21 : vector<16x1xf32>
    %28 = arith.subf %26, %27 : vector<16x1xf32>
    %cst_17 = arith.constant 0.000000e+00 : f32
    %29 = vector.broadcast %cst_17 : f32 to vector<16x1xf32>
    %30 = arith.maximumf %28, %29 : vector<16x1xf32>
    %cst_18 = arith.constant 9.99999997E-7 : f32
    %31 = vector.broadcast %cst_18 : f32 to vector<16x1xf32>
    %32 = arith.addf %30, %31 : vector<16x1xf32>
    %33 = math.rsqrt %32 : vector<16x1xf32>
    %34 = vector.broadcast %21 : vector<16x1xf32> to vector<16x32xf32>
    %35 = arith.subf %17, %34 : vector<16x32xf32>
    %36 = vector.broadcast %33 : vector<16x1xf32> to vector<16x32xf32>
    %37 = arith.mulf %35, %36 : vector<16x32xf32>
    %38 = arith.mulf %37, %16 : vector<16x32xf32>
    %39 = arith.addf %38, %11 : vector<16x32xf32>
    %c0_19 = arith.constant 0 : index
    %c0_20 = arith.constant 0 : index
    %40 = vector.load %arg5[%c0_19, %c0_20] : memref<32x128xf32, #tpu.memory_space<vmem>>, vector<32x128xf32>
    %cst_21 = arith.constant dense<0.000000e+00> : vector<16x128xf32>
    %41 = tpu.matmul %39, %40, %cst_21 {dimension_numbers = #tpu.dot_dimension_numbers<[1], [0], [0], [1], [0, 0, 1, 1], [], []>} : vector<16x32xf32>, vector<32x128xf32>, vector<16x128xf32> -> vector<16x128xf32>
    %c0_22 = arith.constant 0 : index
    %c0_23 = arith.constant 0 : index
    %42 = vector.load %arg8[%c0_22, %c0_23] : memref<1x128xf32, #tpu.memory_space<vmem>>, vector<1x128xf32>
    %43 = vector.broadcast %42 : vector<1x128xf32> to vector<16x128xf32>
    %44 = arith.addf %41, %43 : vector<16x128xf32>
    %c0_24 = arith.constant 0 : index
    %c0_25 = arith.constant 0 : index
    %45 = vector.load %arg9[%c0_24, %c0_25] : memref<16x128xf32, #tpu.memory_space<vmem>>, vector<16x128xf32>
    tpu.vector_store %arg9[%c0_24, %c0_25], %44 {strides = array<i32>} : memref<16x128xf32, #tpu.memory_space<vmem>>, vector<16x128xf32>,
    return
  }
  func.func @transform_0(%arg0: i32) -> (i32, i32) {
    %c0_i32 = arith.constant 0 : i32
    %c0_i32_0 = arith.constant 0 : i32
    return %arg0, %c0_i32 : i32, i32
  }
  func.func @transform_1(%arg0: i32) -> (i32, i32) {
    %c0_i32 = arith.constant 0 : i32
    %c0_i32_0 = arith.constant 0 : i32
    return %arg0, %c0_i32 : i32, i32
  }
  func.func @transform_2(%arg0: i32) -> (i32, i32) {
    %c0_i32 = arith.constant 0 : i32
    %c0_i32_0 = arith.constant 0 : i32
    %c0_i32_1 = arith.constant 0 : i32
    return %c0_i32, %c0_i32_0 : i32, i32
  }
  func.func @transform_3(%arg0: i32) -> (i32, i32) {
    %c0_i32 = arith.constant 0 : i32
    %c0_i32_0 = arith.constant 0 : i32
    %c0_i32_1 = arith.constant 0 : i32
    return %c0_i32, %c0_i32_0 : i32, i32
  }
  func.func @transform_4(%arg0: i32) -> (i32, i32) {
    %c0_i32 = arith.constant 0 : i32
    %c0_i32_0 = arith.constant 0 : i32
    %c0_i32_1 = arith.constant 0 : i32
    return %c0_i32, %c0_i32_0 : i32, i32
  }
  func.func @transform_5(%arg0: i32) -> (i32, i32) {
    %c0_i32 = arith.constant 0 : i32
    %c0_i32_0 = arith.constant 0 : i32
    %c0_i32_1 = arith.constant 0 : i32
    return %c0_i32, %c0_i32_0 : i32, i32
  }
  func.func @transform_6(%arg0: i32) -> (i32, i32) {
    %c0_i32 = arith.constant 0 : i32
    %c0_i32_0 = arith.constant 0 : i32
    %c0_i32_1 = arith.constant 0 : i32
    return %c0_i32, %c0_i32_0 : i32, i32
  }
  func.func @transform_7(%arg0: i32) -> (i32, i32) {
    %c0_i32 = arith.constant 0 : i32
    %c0_i32_0 = arith.constant 0 : i32
    %c0_i32_1 = arith.constant 0 : i32
    return %c0_i32, %c0_i32_0 : i32, i32
  }
  func.func @transform_8(%arg0: i32) -> (i32, i32) {
    %c0_i32 = arith.constant 0 : i32
    %c0_i32_0 = arith.constant 0 : i32
    return %arg0, %c0_i32 : i32, i32
  }
}

module attributes {stable_mosaic.version = 11 : i64} {
  func.func @final_layer_kernel(%arg0: i32, %arg1: memref<16x32xf32, #tpu.memory_space<vmem>>, %arg2: memref<16x32xf32, #tpu.memory_space<vmem>>, %arg3: memref<32x32xf32, #tpu.memory_space<vmem>>, %arg4: memref<32x32xf32, #tpu.memory_space<vmem>>, %arg5: memref<32x128xf32, #tpu.memory_space<vmem>>, %arg6: memref<1x32xf32, #tpu.memory_space<vmem>>, %arg7: memref<1x32xf32, #tpu.memory_space<vmem>>, %arg8: memref<1x128xf32, #tpu.memory_space<vmem>>, %arg9: memref<16x128xf32, #tpu.memory_space<vmem>>) attributes {dimension_semantics = [#tpu.dimension_semantics<parallel>], iteration_bounds = array<i64: 2>, scalar_prefetch = 0 : i64, scratch_operands = 0 : i64, tpu.core_type = #tpu.core_type<tc>, window_params = [{transform_indices = @transform_0, window_bounds = array<i64: 16, 32>}, {transform_indices = @transform_1, window_bounds = array<i64: 16, 32>}, {pipeline_mode = #tpu.pipeline_mode<synchronous>, transform_indices = @transform_2, window_bounds = array<i64: 32, 32>}, {pipeline_mode = #tpu.pipeline_mode<synchronous>, transform_indices = @transform_3, window_bounds = array<i64: 32, 32>}, {pipeline_mode = #tpu.pipeline_mode<synchronous>, transform_indices = @transform_4, window_bounds = array<i64: 32, 128>}, {pipeline_mode = #tpu.pipeline_mode<synchronous>, transform_indices = @transform_5, window_bounds = array<i64: 1, 32>}, {pipeline_mode = #tpu.pipeline_mode<synchronous>, transform_indices = @transform_6, window_bounds = array<i64: 1, 32>}, {pipeline_mode = #tpu.pipeline_mode<synchronous>, transform_indices = @transform_7, window_bounds = array<i64: 1, 128>}, {transform_indices = @transform_8, window_bounds = array<i64: 16, 128>}]} {
    %c0 = arith.constant 0 : index
    %c0_0 = arith.constant 0 : index
    %0 = vector.load %arg2[%c0, %c0_0] : memref<16x32xf32, #tpu.memory_space<vmem>>, vector<16x32xf32>
    %1 = arith.negf %0 : vector<16x32xf32>
    %2 = math.exp %1 : vector<16x32xf32>
    %cst = arith.constant 1.000000e+00 : f32
    %3 = vector.broadcast %cst : f32 to vector<16x32xf32>
    %4 = arith.addf %3, %2 : vector<16x32xf32>
    %5 = arith.divf %3, %4 : vector<16x32xf32>
    %6 = arith.mulf %0, %5 : vector<16x32xf32>
    %c0_1 = arith.constant 0 : index
    %c0_2 = arith.constant 0 : index
    %7 = vector.load %arg3[%c0_1, %c0_2] : memref<32x32xf32, #tpu.memory_space<vmem>>, vector<32x32xf32>
    %cst_3 = arith.constant dense<0.000000e+00> : vector<16x32xf32>
    %8 = tpu.matmul %6, %7, %cst_3 {dimension_numbers = #tpu.dot_dimension_numbers<[1], [0], [0], [1], [0, 0, 1, 1], [], []>} : vector<16x32xf32>, vector<32x32xf32>, vector<16x32xf32> -> vector<16x32xf32>
    %c0_4 = arith.constant 0 : index
    %c0_5 = arith.constant 0 : index
    %9 = vector.load %arg6[%c0_4, %c0_5] : memref<1x32xf32, #tpu.memory_space<vmem>>, vector<1x32xf32>
    %10 = vector.broadcast %9 : vector<1x32xf32> to vector<16x32xf32>
    %11 = arith.addf %8, %10 : vector<16x32xf32>
    %c0_6 = arith.constant 0 : index
    %c0_7 = arith.constant 0 : index
    %12 = vector.load %arg4[%c0_6, %c0_7] : memref<32x32xf32, #tpu.memory_space<vmem>>, vector<32x32xf32>
    %cst_8 = arith.constant dense<0.000000e+00> : vector<16x32xf32>
    %13 = tpu.matmul %6, %12, %cst_8 {dimension_numbers = #tpu.dot_dimension_numbers<[1], [0], [0], [1], [0, 0, 1, 1], [], []>} : vector<16x32xf32>, vector<32x32xf32>, vector<16x32xf32> -> vector<16x32xf32>
    %c0_9 = arith.constant 0 : index
    %c0_10 = arith.constant 0 : index
    %14 = vector.load %arg7[%c0_9, %c0_10] : memref<1x32xf32, #tpu.memory_space<vmem>>, vector<1x32xf32>
    %15 = vector.broadcast %14 : vector<1x32xf32> to vector<16x32xf32>
    %16 = arith.addf %13, %15 : vector<16x32xf32>
    %c0_11 = arith.constant 0 : index
    %c0_12 = arith.constant 0 : index
    %17 = vector.load %arg1[%c0_11, %c0_12] : memref<16x32xf32, #tpu.memory_space<vmem>>, vector<16x32xf32>
    %cst_13 = arith.constant dense<0.000000e+00> : vector<16xf32>
    %18 = vector.multi_reduction <add>, %17, %cst_13 [1] : vector<16x32xf32> to vector<16xf32>
    %19 = vector.shape_cast %18 : vector<16xf32> to vector<16x1xf32>
    %cst_14 = arith.constant 3.125000e-02 : f32
    %20 = vector.broadcast %cst_14 : f32 to vector<16x1xf32>
    %21 = arith.mulf %19, %20 : vector<16x1xf32>
    %22 = arith.mulf %17, %17 : vector<16x32xf32>
    %cst_15 = arith.constant dense<0.000000e+00> : vector<16xf32>
    %23 = vector.multi_reduction <add>, %22, %cst_15 [1] : vector<16x32xf32> to vector<16xf32>
    %24 = vector.shape_cast %23 : vector<16xf32> to vector<16x1xf32>
    %cst_16 = arith.constant 3.125000e-02 : f32
    %25 = vector.broadcast %cst_16 : f32 to vector<16x1xf32>
    %26 = arith.mulf %24, %25 : vector<16x1xf32>
    %27 = arith.mulf %21, %21 : vector<16x1xf32>
    %28 = arith.subf %26, %27 : vector<16x1xf32>
    %cst_17 = arith.constant 0.000000e+00 : f32
    %29 = vector.broadcast %cst_17 : f32 to vector<16x1xf32>
    %30 = arith.maximumf %28, %29 : vector<16x1xf32>
    %cst_18 = arith.constant 9.99999997E-7 : f32
    %31 = vector.broadcast %cst_18 : f32 to vector<16x1xf32>
    %32 = arith.addf %30, %31 : vector<16x1xf32>
    %33 = math.rsqrt %32 : vector<16x1xf32>
    %34 = vector.broadcast %21 : vector<16x1xf32> to vector<16x32xf32>
    %35 = arith.subf %17, %34 : vector<16x32xf32>
    %36 = vector.broadcast %33 : vector<16x1xf32> to vector<16x32xf32>
    %37 = arith.mulf %35, %36 : vector<16x32xf32>
    %38 = arith.mulf %37, %16 : vector<16x32xf32>
    %39 = arith.addf %38, %11 : vector<16x32xf32>
    %c0_19 = arith.constant 0 : index
    %c0_20 = arith.constant 0 : index
    %40 = vector.load %arg5[%c0_19, %c0_20] : memref<32x128xf32, #tpu.memory_space<vmem>>, vector<32x128xf32>
    %cst_21 = arith.constant dense<0.000000e+00> : vector<16x128xf32>
    %41 = tpu.matmul %39, %40, %cst_21 {dimension_numbers = #tpu.dot_dimension_numbers<[1], [0], [0], [1], [0, 0, 1, 1], [], []>} : vector<16x32xf32>, vector<32x128xf32>, vector<16x128xf32> -> vector<16x128xf32>
    %c0_22 = arith.constant 0 : index
    %c0_23 = arith.constant 0 : index
    %42 = vector.load %arg8[%c0_22, %c0_23] : memref<1x128xf32, #tpu.memory_space<vmem>>, vector<1x128xf32>
    %43 = vector.broadcast %42 : vector<1x128xf32> to vector<16x128xf32>
    %44 = arith.addf %41, %43 : vector<16x128xf32>
    %c0_24 = arith.constant 0 : index
    %c0_25 = arith.constant 0 : index
    %45 = vector.load %arg9[%c0_24, %c0_25] : memref<16x128xf32, #tpu.memory_space<vmem>>, vector<16x128xf32>
    tpu.vector_store %arg9[%c0_24, %c0_25], %44 {strides = array<i32>} : memref<16x128xf32, #tpu.memory_space<vmem>>, vector<16x128xf32>,
    return
  }
  func.func @transform_0(%arg0: i32) -> (i32, i32) {
    %c0_i32 = arith.constant 0 : i32
    %c0_i32_0 = arith.constant 0 : i32
    return %arg0, %c0_i32 : i32, i32
  }
  func.func @transform_1(%arg0: i32) -> (i32, i32) {
    %c0_i32 = arith.constant 0 : i32
    %c0_i32_0 = arith.constant 0 : i32
    return %arg0, %c0_i32 : i32, i32
  }
  func.func @transform_2(%arg0: i32) -> (i32, i32) {
    %c0_i32 = arith.constant 0 : i32
    %c0_i32_0 = arith.constant 0 : i32
    %c0_i32_1 = arith.constant 0 : i32
    return %c0_i32, %c0_i32_0 : i32, i32
  }
  func.func @transform_3(%arg0: i32) -> (i32, i32) {
    %c0_i32 = arith.constant 0 : i32
    %c0_i32_0 = arith.constant 0 : i32
    %c0_i32_1 = arith.constant 0 : i32
    return %c0_i32, %c0_i32_0 : i32, i32
  }
  func.func @transform_4(%arg0: i32) -> (i32, i32) {
    %c0_i32 = arith.constant 0 : i32
    %c0_i32_0 = arith.constant 0 : i32
    %c0_i32_1 = arith.constant 0 : i32
    return %c0_i32, %c0_i32_0 : i32, i32
  }
  func.func @transform_5(%arg0: i32) -> (i32, i32) {
    %c0_i32 = arith.constant 0 : i32
    %c0_i32_0 = arith.constant 0 : i32
    %c0_i32_1 = arith.constant 0 : i32
    return %c0_i32, %c0_i32_0 : i32, i32
  }
  func.func @transform_6(%arg0: i32) -> (i32, i32) {
    %c0_i32 = arith.constant 0 : i32
    %c0_i32_0 = arith.constant 0 : i32
    %c0_i32_1 = arith.constant 0 : i32
    return %c0_i32, %c0_i32_0 : i32, i32
  }
  func.func @transform_7(%arg0: i32) -> (i32, i32) {
    %c0_i32 = arith.constant 0 : i32
    %c0_i32_0 = arith.constant 0 : i32
    %c0_i32_1 = arith.constant 0 : i32
    return %c0_i32, %c0_i32_0 : i32, i32
  }
  func.func @transform_8(%arg0: i32) -> (i32, i32) {
    %c0_i32 = arith.constant 0 : i32
    %c0_i32_0 = arith.constant 0 : i32
    return %arg0, %c0_i32 : i32, i32
  }
}

</mosaic_0001>

<llo_original>
// kernel: tpu_custom_call.1
$region0: #{tpu_custom_call.1}
  #allocation0 [shape = 'u32[]', space=smem, size = 0x4, offset = 0x4, fixed_abs, tag = 'smem constant byte address 0x4 - core index']
  #allocation1 [shape = 'u32[72,128]{1,0:T(1,128)}', space=vmem, size = 0x9000, scoped, tag = 'internal scratch']
  %s0 = inlined_call_operand.hbm [shape: f32[20,32], index: 0, kind: input, shape index: {}]
  %s1 = inlined_call_operand.hbm [shape: f32[20,32], index: 1, kind: input, shape index: {}]
  %s2 = inlined_call_operand.hbm [shape: f32[32,32], index: 2, kind: input, shape index: {}]
  %s3 = inlined_call_operand.hbm [shape: f32[32,32], index: 3, kind: input, shape index: {}]
  %s4 = inlined_call_operand.hbm [shape: f32[32,128], index: 4, kind: input, shape index: {}]
  %s5 = inlined_call_operand.vmem [shape: f32[1,32], index: 5, kind: input, shape index: {}]
  %s6 = inlined_call_operand.vmem [shape: f32[1,32], index: 6, kind: input, shape index: {}]
  %s7 = inlined_call_operand.vmem [shape: f32[1,128], index: 7, kind: input, shape index: {}]
  %s8 = inlined_call_operand.hbm [shape: f32[20,128], index: 8, kind: output, shape index: {}]
  %s9 = sld [smem:[#allocation0]]
  $region85: #{tpu_custom_call.1} parent=0
    _
  %s11 = ssub.s32 1, %s9
  %s12 = scalar_select 0, %s11, %s9
  $region1: #{tpu_custom_call.1} parent=0
    #allocation2 [shape = 'u8[16384]{0}', space=vmem, size = 0x4000, scoped, tag = 'input window, operand 0']
    #allocation3 [shape = 's32[2]{0}', space=sflag, size = 0x8, scoped, tag = 'scoped memory for tpu_custom_call.1']
    #allocation4 [shape = 's32[2]{0}', space=sflag, size = 0x8, scoped, tag = 'scoped memory for tpu_custom_call.1']
    #allocation5 [shape = 'u8[16384]{0}', space=vmem, size = 0x4000, scoped, tag = 'input window, operand 1']
    #allocation6 [shape = 's32[2]{0}', space=sflag, size = 0x8, scoped, tag = 'scoped memory for tpu_custom_call.1']
    #allocation7 [shape = 'u8[16384]{0}', space=vmem, size = 0x4000, scoped, tag = 'input window, operand 2, single buffered']
    #allocation8 [shape = 'u8[16384]{0}', space=vmem, size = 0x4000, scoped, tag = 'input window, operand 3, single buffered']
    #allocation9 [shape = 's32[1]{0}', space=sflag, size = 0x4, scoped, tag = 'scoped memory for tpu_custom_call.1']
    #allocation10 [shape = 'u8[16384]{0}', space=vmem, size = 0x4000, scoped, tag = 'input window, operand 4, single buffered']
    #allocation11 [shape = 'u8[16384]{0}', space=vmem, size = 0x4000, scoped, tag = 'output window, operand 0']
    %13 = vsyncpa [#allocation3], 0
    %s14 = scalar_lea.sflag [#allocation3], 1
    %15 = vsyncpa %s14, 0
    %16 = vsyncpa [#allocation6], 0
    %s17 = scalar_lea.sflag [#allocation6], 1
    %18 = vsyncpa %s17, 0
    %19 = vsyncpa [#allocation9], 0
    %20 = vsyncpa [#allocation4], 0
    %s21 = scalar_lea.sflag [#allocation4], 1
    %22 = vsyncpa %s21, 0
    loop: start=0, step=1, limit=4
    $region2: #{tpu_custom_call.1} parent=1 // loop_pre_header
      _
    $region3: #{tpu_custom_call.1} parent=1 // loop_header
      %s24 = sphi 0, %s28
      %p25 = scmp.ge.s32.totalorder %s24, 4
      %s34 = sphi 0, %s36
      %s37 = sphi 0, %s34
      %s38 = sphi 0, %s37
      %s54 = sphi 0, %s38
      %s60 = sphi 0, %s62
      %s63 = sphi 0, %s60
      %s64 = sphi 0, %s63
      %s80 = sphi 0, %s64
      %s84 = sphi 0, %s84
      %s86 = sphi 0, %s84
      %s87 = sphi 0, %s86
      %s101 = sphi 0, %s87
      %s105 = sphi 0, %s105
      %s107 = sphi 0, %s105
      %s108 = sphi 0, %s107
      %s122 = sphi 0, %s108
      %s126 = sphi 0, %s126
      %s128 = sphi 0, %s126
      %s129 = sphi 0, %s128
      %s143 = sphi 0, %s129
      %s147 = sphi 0, %s147
      %s149 = sphi 0, %s147
      %s150 = sphi 0, %s149
      %s164 = sphi 0, %s150
      %s168 = sphi 0, %s168
      %s170 = sphi 0, %s168
      %s171 = sphi 0, %s170
      %s185 = sphi 0, %s171
      %s189 = sphi 0, %s189
      %s191 = sphi 0, %s189
      %s192 = sphi 0, %s191
      %s206 = sphi 0, %s192
      %s212 = sphi 0, %s214
      %s215 = sphi 0, %s212
      %s216 = sphi 0, %s215
      %s232 = sphi 0, %s216
    $region4: #{tpu_custom_call.1} parent=1 // loop_header_branch
      %27 = sbr.rel (%p25) target = $region8
    $region5: #{tpu_custom_call.1} parent=1 // loop_body
      %s29 = ssub.s32 %s24, 1
      %s30 = ssub.s32 %s24, 2
      %s31 = sadd.s32 %s24, 1
      %s32 = ssub.s32 %s24, %s31
      %p33 = scmp.eq.s32.totalorder %s32, 0
      %s35 = sadd.s32 %s34, 1
      %s36 = scalar_select %p33, %s34, %s35
      %p39 = pneg %p33
      %p40 = scmp.eq.s32.totalorder %s24, 1
      %p41 = por %p39, %p40
      %p42 = scmp.ne.s32.totalorder %s34, %s37
      %p43 = scmp.eq.s32.totalorder %s24, 0
      %p44 = por %p42, %p43
      %p45 = scmp.ne.s32.totalorder %s34, %s37
      %p46 = scmp.eq.s32.totalorder %s29, 1
      %p47 = por %p45, %p46
      %p48 = scmp.ne.s32.totalorder %s37, %s38
      %p49 = scmp.eq.s32.totalorder %s29, 0
      %p50 = por %p48, %p49
      %p51 = scmp.ne.s32.totalorder %s37, %s38
      %p52 = scmp.eq.s32.totalorder %s30, 1
      %p53 = por %p51, %p52
      %p55 = scmp.ne.s32.totalorder %s38, %s54
      %p56 = scmp.eq.s32.totalorder %s30, 0
      %p57 = por %p55, %p56
      %s58 = ssub.s32 %s24, %s31
      %p59 = scmp.eq.s32.totalorder %s58, 0
      %s61 = sadd.s32 %s60, 1
      %s62 = scalar_select %p59, %s60, %s61
      %p65 = pneg %p59
      %p66 = scmp.eq.s32.totalorder %s24, 1
      %p67 = por %p65, %p66
      %p68 = scmp.ne.s32.totalorder %s60, %s63
      %p69 = scmp.eq.s32.totalorder %s24, 0
      %p70 = por %p68, %p69
      %p71 = scmp.ne.s32.totalorder %s60, %s63
      %p72 = scmp.eq.s32.totalorder %s29, 1
      %p73 = por %p71, %p72
      %p74 = scmp.ne.s32.totalorder %s63, %s64
      %p75 = scmp.eq.s32.totalorder %s29, 0
      %p76 = por %p74, %p75
      %p77 = scmp.ne.s32.totalorder %s63, %s64
      %p78 = scmp.eq.s32.totalorder %s30, 1
      %p79 = por %p77, %p78
      %p81 = scmp.ne.s32.totalorder %s64, %s80
      %p82 = scmp.eq.s32.totalorder %s30, 0
      %p83 = por %p81, %p82
      %s85 = sadd.s32 %s84, 1
      %p88 = scmp.eq.s32.totalorder %s24, 1
      %p89 = scmp.ne.s32.totalorder %s84, %s86
      %p90 = scmp.eq.s32.totalorder %s24, 0
      %p91 = por %p89, %p90
      %p92 = scmp.ne.s32.totalorder %s84, %s86
      %p93 = scmp.eq.s32.totalorder %s29, 1
      %p94 = por %p92, %p93
      %p95 = scmp.ne.s32.totalorder %s86, %s87
      %p96 = scmp.eq.s32.totalorder %s29, 0
      %p97 = por %p95, %p96
      %p98 = scmp.ne.s32.totalorder %s86, %s87
      %p99 = scmp.eq.s32.totalorder %s30, 1
      %p100 = por %p98, %p99
      %p102 = scmp.ne.s32.totalorder %s87, %s101
      %p103 = scmp.eq.s32.totalorder %s30, 0
      %p104 = por %p102, %p103
      %s106 = sadd.s32 %s105, 1
      %p109 = scmp.eq.s32.totalorder %s24, 1
      %p110 = scmp.ne.s32.totalorder %s105, %s107
      %p111 = scmp.eq.s32.totalorder %s24, 0
      %p112 = por %p110, %p111
      %p113 = scmp.ne.s32.totalorder %s105, %s107
      %p114 = scmp.eq.s32.totalorder %s29, 1
      %p115 = por %p113, %p114
      %p116 = scmp.ne.s32.totalorder %s107, %s108
      %p117 = scmp.eq.s32.totalorder %s29, 0
      %p118 = por %p116, %p117
      %p119 = scmp.ne.s32.totalorder %s107, %s108
      %p120 = scmp.eq.s32.totalorder %s30, 1
      %p121 = por %p119, %p120
      %p123 = scmp.ne.s32.totalorder %s108, %s122
      %p124 = scmp.eq.s32.totalorder %s30, 0
      %p125 = por %p123, %p124
      %s127 = sadd.s32 %s126, 1
      %p130 = scmp.eq.s32.totalorder %s24, 1
      %p131 = scmp.ne.s32.totalorder %s126, %s128
      %p132 = scmp.eq.s32.totalorder %s24, 0
      %p133 = por %p131, %p132
      %p134 = scmp.ne.s32.totalorder %s126, %s128
      %p135 = scmp.eq.s32.totalorder %s29, 1
      %p136 = por %p134, %p135
      %p137 = scmp.ne.s32.totalorder %s128, %s129
      %p138 = scmp.eq.s32.totalorder %s29, 0
      %p139 = por %p137, %p138
      %p140 = scmp.ne.s32.totalorder %s128, %s129
      %p141 = scmp.eq.s32.totalorder %s30, 1
      %p142 = por %p140, %p141
      %p144 = scmp.ne.s32.totalorder %s129, %s143
      %p145 = scmp.eq.s32.totalorder %s30, 0
      %p146 = por %p144, %p145
      %s148 = sadd.s32 %s147, 1
      %p151 = scmp.eq.s32.totalorder %s24, 1
      %p152 = scmp.ne.s32.totalorder %s147, %s149
      %p153 = scmp.eq.s32.totalorder %s24, 0
      %p154 = por %p152, %p153
      %p155 = scmp.ne.s32.totalorder %s147, %s149
      %p156 = scmp.eq.s32.totalorder %s29, 1
      %p157 = por %p155, %p156
      %p158 = scmp.ne.s32.totalorder %s149, %s150
      %p159 = scmp.eq.s32.totalorder %s29, 0
      %p160 = por %p158, %p159
      %p161 = scmp.ne.s32.totalorder %s149, %s150
      %p162 = scmp.eq.s32.totalorder %s30, 1
      %p163 = por %p161, %p162
      %p165 = scmp.ne.s32.totalorder %s150, %s164
      %p166 = scmp.eq.s32.totalorder %s30, 0
      %p167 = por %p165, %p166
      %s169 = sadd.s32 %s168, 1
      %p172 = scmp.eq.s32.totalorder %s24, 1
      %p173 = scmp.ne.s32.totalorder %s168, %s170
      %p174 = scmp.eq.s32.totalorder %s24, 0
      %p175 = por %p173, %p174
      %p176 = scmp.ne.s32.totalorder %s168, %s170
      %p177 = scmp.eq.s32.totalorder %s29, 1
      %p178 = por %p176, %p177
      %p179 = scmp.ne.s32.totalorder %s170, %s171
      %p180 = scmp.eq.s32.totalorder %s29, 0
      %p181 = por %p179, %p180
      %p182 = scmp.ne.s32.totalorder %s170, %s171
      %p183 = scmp.eq.s32.totalorder %s30, 1
      %p184 = por %p182, %p183
      %p186 = scmp.ne.s32.totalorder %s171, %s185
      %p187 = scmp.eq.s32.totalorder %s30, 0
      %p188 = por %p186, %p187
      %s190 = sadd.s32 %s189, 1
      %p193 = scmp.eq.s32.totalorder %s24, 1
      %p194 = scmp.ne.s32.totalorder %s189, %s191
      %p195 = scmp.eq.s32.totalorder %s24, 0
      %p196 = por %p194, %p195
      %p197 = scmp.ne.s32.totalorder %s189, %s191
      %p198 = scmp.eq.s32.totalorder %s29, 1
      %p199 = por %p197, %p198
      %p200 = scmp.ne.s32.totalorder %s191, %s192
      %p201 = scmp.eq.s32.totalorder %s29, 0
      %p202 = por %p200, %p201
      %p203 = scmp.ne.s32.totalorder %s191, %s192
      %p204 = scmp.eq.s32.totalorder %s30, 1
      %p205 = por %p203, %p204
      %p207 = scmp.ne.s32.totalorder %s192, %s206
      %p208 = scmp.eq.s32.totalorder %s30, 0
      %p209 = por %p207, %p208
      %s210 = ssub.s32 %s24, %s31
      %p211 = scmp.eq.s32.totalorder %s210, 0
      %s213 = sadd.s32 %s212, 1
      %s214 = scalar_select %p211, %s212, %s213
      %p217 = pneg %p211
      %p218 = scmp.eq.s32.totalorder %s24, 1
      %p219 = por %p217, %p218
      %p220 = scmp.ne.s32.totalorder %s212, %s215
      %p221 = scmp.eq.s32.totalorder %s24, 0
      %p222 = por %p220, %p221
      %p223 = scmp.ne.s32.totalorder %s212, %s215
      %p224 = scmp.eq.s32.totalorder %s29, 1
      %p225 = por %p223, %p224
      %p226 = scmp.ne.s32.totalorder %s215, %s216
      %p227 = scmp.eq.s32.totalorder %s29, 0
      %p228 = por %p226, %p227
      %p229 = scmp.ne.s32.totalorder %s215, %s216
      %p230 = scmp.eq.s32.totalorder %s30, 1
      %p231 = por %p229, %p230
      %p233 = scmp.ne.s32.totalorder %s216, %s232
      %p234 = scmp.eq.s32.totalorder %s30, 0
      %p235 = por %p233, %p234
      %p236 = scmp.le.s32.totalorder 1, %s24
      %p237 = scmp.lt.s32.totalorder %s24, 3
      %p238 = pnand %p236, %p237
      %p239 = pneg %p238
      // Predicated region
      $region9: #{tpu_custom_call.1} parent=5 // pred_check
        _
      $region10: #{tpu_custom_call.1} parent=5 // pred_check_branch
        %241 = sbr.rel (%p238) target = $region12
      $region11: #{tpu_custom_call.1} parent=5 // pred_region
        %s242 = ssub.s32 %s24, 1
        // Predicated region
        $region13: #{tpu_custom_call.1} parent=11 // pred_check
          %p243 = pneg %p97
        $region14: #{tpu_custom_call.1} parent=11 // pred_check_branch
          %245 = sbr.rel (%p243) target = $region16
        $region15: #{tpu_custom_call.1} parent=11 // pred_region
          %247 = vsyncadd [#allocation6], 0
          %s248 = sshll.u32 %s2, 4
          %s249 = int_to_ptr.hbm [resolvable:$true] %s248
          %s250 = sshll.u32 [#allocation7], 4
          %s251 = int_to_ptr.vmem [resolvable:$true] %s250
          %256 = dma.hbm_to_vmem [thread:$0]  %s249, 512, %s251, [#allocation6], 128, 128, 8
        $region16: #{tpu_custom_call.1} parent=11 // pred_fallthru
          _
        // Predicated region
        $region17: #{tpu_custom_call.1} parent=11 // pred_check
          %p257 = pneg %p118
        $region18: #{tpu_custom_call.1} parent=11 // pred_check_branch
          %259 = sbr.rel (%p257) target = $region20
        $region19: #{tpu_custom_call.1} parent=11 // pred_region
          %261 = vsyncadd [#allocation9], 0
          %s262 = sshll.u32 %s3, 4
          %s263 = int_to_ptr.hbm [resolvable:$true] %s262
          %s264 = sshll.u32 [#allocation8], 4
          %s265 = int_to_ptr.vmem [resolvable:$true] %s264
          %270 = dma.hbm_to_vmem [thread:$0]  %s263, 512, %s265, [#allocation9], 128, 128, 8
        $region20: #{tpu_custom_call.1} parent=11 // pred_fallthru
          _
        // Predicated region
        $region21: #{tpu_custom_call.1} parent=11 // pred_check
          %p271 = pneg %p139
        $region22: #{tpu_custom_call.1} parent=11 // pred_check_branch
          %273 = sbr.rel (%p271) target = $region24
        $region23: #{tpu_custom_call.1} parent=11 // pred_region
          %275 = vsyncadd [#allocation9], 0
          %s276 = sshll.u32 %s4, 4
          %s277 = int_to_ptr.hbm [resolvable:$true] %s276
          %s278 = sshll.u32 [#allocation10], 4
          %s279 = int_to_ptr.vmem [resolvable:$true] %s278
          %284 = dma.hbm_to_vmem [thread:$0]  %s277, 512, %s279, [#allocation9], 128, 128, 8
        $region24: #{tpu_custom_call.1} parent=11 // pred_fallthru
          _
        // Predicated region
        $region25: #{tpu_custom_call.1} parent=11 // pred_check
          %p285 = pneg %p160
        $region26: #{tpu_custom_call.1} parent=11 // pred_check_branch
          %287 = sbr.rel (%p285) target = $region28
        $region27: #{tpu_custom_call.1} parent=11 // pred_region
          _
        $region28: #{tpu_custom_call.1} parent=11 // pred_fallthru
          _
        // Predicated region
        $region29: #{tpu_custom_call.1} parent=11 // pred_check
          %p288 = pneg %p181
        $region30: #{tpu_custom_call.1} parent=11 // pred_check_branch
          %290 = sbr.rel (%p288) target = $region32
        $region31: #{tpu_custom_call.1} parent=11 // pred_region
          _
        $region32: #{tpu_custom_call.1} parent=11 // pred_fallthru
          _
        // Predicated region
        $region33: #{tpu_custom_call.1} parent=11 // pred_check
          %p291 = pneg %p202
        $region34: #{tpu_custom_call.1} parent=11 // pred_check_branch
          %293 = sbr.rel (%p291) target = $region36
        $region35: #{tpu_custom_call.1} parent=11 // pred_region
          _
        $region36: #{tpu_custom_call.1} parent=11 // pred_fallthru
          _
      $region12: #{tpu_custom_call.1} parent=5 // pred_fallthru
        _
      %p294 = scmp.lt.s32.totalorder %s24, 2
      // Predicated region
      $region37: #{tpu_custom_call.1} parent=5 // pred_check
        %p295 = pneg %p294
      $region38: #{tpu_custom_call.1} parent=5 // pred_check_branch
        %297 = sbr.rel (%p295) target = $region40
      $region39: #{tpu_custom_call.1} parent=5 // pred_region
        // Predicated region
        $region41: #{tpu_custom_call.1} parent=39 // pred_check
          %p298 = pneg %p44
        $region42: #{tpu_custom_call.1} parent=39 // pred_check_branch
          %300 = sbr.rel (%p298) target = $region44
        $region43: #{tpu_custom_call.1} parent=39 // pred_region
          %s301 = sand.u32 %s34, 1
          %s302 = scalar_lea.sflag [#allocation3], %s301
          %s303 = sand.u32 %s34, 1
          %s304 = smul.addr %s303, 16
          %s305 = scalar_lea.vmem [#allocation2], %s304
          %s306 = smul.u32 2, %s24
          %s307 = ssub.s32 3, %s306
          %p308 = scmp.lt.s32.totalorder %s307, 2
          %s309 = scalar_select %p308, %s307, 2
          %s310 = smul.u32 8, %s309
          %s311 = ssub.s32 16, %s310
          %s312 = sshll.u32 %s311, 4
          %313 = vsyncadd %s302, %s312
          %p314 = scmp.ne.s32.totalorder 0, %s310
          %s315 = smul.addr %s306, 8
          %s316 = scalar_lea.hbm %s0, %s315
          %s317 = smul.u32 8, %s309
          %s318 = sshll.u32 %s316, 4
          %s319 = int_to_ptr.hbm [resolvable:$true] %s318
          %s320 = sshll.u32 %s305, 4
          %s321 = int_to_ptr.vmem [resolvable:$true] %s320
          %s322 = sshll.u32 %s317, 4
          %326 = dma.hbm_to_vmem [thread:$0]  (%p314), %s319, %s322, %s321, %s302, 128, 128, 8
        $region44: #{tpu_custom_call.1} parent=39 // pred_fallthru
          _
        // Predicated region
        $region45: #{tpu_custom_call.1} parent=39 // pred_check
          %p327 = pneg %p70
        $region46: #{tpu_custom_call.1} parent=39 // pred_check_branch
          %329 = sbr.rel (%p327) target = $region48
        $region47: #{tpu_custom_call.1} parent=39 // pred_region
          %s330 = sand.u32 %s24, 1
          %s331 = scalar_lea.sflag [#allocation6], %s330
          %s332 = sand.u32 %s60, 1
          %s333 = smul.addr %s332, 16
          %s334 = scalar_lea.vmem [#allocation5], %s333
          %s335 = smul.u32 2, %s24
          %s336 = ssub.s32 3, %s335
          %p337 = scmp.lt.s32.totalorder %s336, 2
          %s338 = scalar_select %p337, %s336, 2
          %s339 = smul.u32 8, %s338
          %s340 = ssub.s32 16, %s339
          %s341 = sshll.u32 %s340, 4
          %342 = vsyncadd %s331, %s341
          %p343 = scmp.ne.s32.totalorder 0, %s339
          %s344 = smul.addr %s335, 8
          %s345 = scalar_lea.hbm %s1, %s344
          %s346 = smul.u32 8, %s338
          %s347 = sshll.u32 %s345, 4
          %s348 = int_to_ptr.hbm [resolvable:$true] %s347
          %s349 = sshll.u32 %s334, 4
          %s350 = int_to_ptr.vmem [resolvable:$true] %s349
          %s351 = sshll.u32 %s346, 4
          %355 = dma.hbm_to_vmem [thread:$0]  (%p343), %s348, %s351, %s350, %s331, 128, 128, 8
        $region48: #{tpu_custom_call.1} parent=39 // pred_fallthru
          _
      $region40: #{tpu_custom_call.1} parent=5 // pred_fallthru
        _
      %p356 = scmp.le.s32.totalorder 1, %s24
      %p357 = scmp.lt.s32.totalorder %s24, 3
      %p358 = pnand %p356, %p357
      %p359 = pneg %p358
      // Predicated region
      $region49: #{tpu_custom_call.1} parent=5 // pred_check
        _
      $region50: #{tpu_custom_call.1} parent=5 // pred_check_branch
        %361 = sbr.rel (%p358) target = $region52
      $region51: #{tpu_custom_call.1} parent=5 // pred_region
        %s362 = ssub.s32 %s24, 1
        %s363 = sand.u32 %s37, 1
        %s364 = scalar_lea.sflag [#allocation3], %s363
        %s365 = sand.u32 %s37, 1
        %s366 = smul.addr %s365, 16
        %s367 = scalar_lea.vmem [#allocation2], %s366
        // Predicated region
        $region53: #{tpu_custom_call.1} parent=51 // pred_check
          %p368 = pneg %p50
        $region54: #{tpu_custom_call.1} parent=51 // pred_check_branch
          %370 = sbr.rel (%p368) target = $region56
        $region55: #{tpu_custom_call.1} parent=51 // pred_region
          %372 = dma.done %s364, 256
        $region56: #{tpu_custom_call.1} parent=51 // pred_fallthru
          _
        %s373 = sand.u32 %s29, 1
        %s374 = scalar_lea.sflag [#allocation6], %s373
        %s375 = sand.u32 %s63, 1
        %s376 = smul.addr %s375, 16
        %s377 = scalar_lea.vmem [#allocation5], %s376
        // Predicated region
        $region57: #{tpu_custom_call.1} parent=51 // pred_check
          %p378 = pneg %p76
        $region58: #{tpu_custom_call.1} parent=51 // pred_check_branch
          %380 = sbr.rel (%p378) target = $region60
        $region59: #{tpu_custom_call.1} parent=51 // pred_region
          %382 = dma.done %s374, 256
        $region60: #{tpu_custom_call.1} parent=51 // pred_fallthru
          _
        // Predicated region
        $region61: #{tpu_custom_call.1} parent=51 // pred_check
          %p383 = pneg %p97
        $region62: #{tpu_custom_call.1} parent=51 // pred_check_branch
          %385 = sbr.rel (%p383) target = $region64
        $region63: #{tpu_custom_call.1} parent=51 // pred_region
          %387 = dma.done [#allocation6], 512
        $region64: #{tpu_custom_call.1} parent=51 // pred_fallthru
          _
        // Predicated region
        $region65: #{tpu_custom_call.1} parent=51 // pred_check
          %p388 = pneg %p118
        $region66: #{tpu_custom_call.1} parent=51 // pred_check_branch
          %390 = sbr.rel (%p388) target = $region68
        $region67: #{tpu_custom_call.1} parent=51 // pred_region
          %392 = dma.done [#allocation9], 512
        $region68: #{tpu_custom_call.1} parent=51 // pred_fallthru
          _
        // Predicated region
        $region69: #{tpu_custom_call.1} parent=51 // pred_check
          %p393 = pneg %p139
        $region70: #{tpu_custom_call.1} parent=51 // pred_check_branch
          %395 = sbr.rel (%p393) target = $region72
        $region71: #{tpu_custom_call.1} parent=51 // pred_region
          %397 = dma.done [#allocation9], 512
        $region72: #{tpu_custom_call.1} parent=51 // pred_fallthru
          _
        %s398 = sand.u32 %s37, 1
        %s399 = scalar_lea.sflag [#allocation3], %s398
        %s400 = sand.u32 %s37, 1
        %s401 = smul.addr %s400, 16
        %s402 = scalar_lea.vmem [#allocation2], %s401
        %p403 = pneg %p50
        %p404 = pneg %p47
        %s405 = sand.u32 %s29, 1
        %s406 = scalar_lea.sflag [#allocation6], %s405
        %s407 = sand.u32 %s63, 1
        %s408 = smul.addr %s407, 16
        %s409 = scalar_lea.vmem [#allocation5], %s408
        %p410 = pneg %p76
        %p411 = pneg %p73
        %p412 = pneg %p97
        %p413 = pneg %p94
        %p414 = pneg %p118
        %p415 = pneg %p115
        %p416 = pneg %p139
        %p417 = pneg %p136
        %p418 = pneg %p160
        %p419 = pneg %p157
        %p420 = pneg %p181
        %p421 = pneg %p178
        %p422 = pneg %p202
        %p423 = pneg %p199
        %p424 = pneg %p228
        %p425 = pneg %p225
        %s426 = sand.u32 %s215, 1
        %s427 = scalar_lea.sflag [#allocation4], %s426
        %s428 = sand.u32 %s215, 1
        %s429 = smul.addr %s428, 16
        %s430 = scalar_lea.vmem [#allocation11], %s429
        %s431 = smul.u32 2, %s29
        %s432 = ssub.s32 3, %s431
        %p433 = scmp.lt.s32.totalorder %s432, 2
        %s434 = scalar_select %p433, %s432, 2
        %s435 = smul.u32 8, %s434
        %s436 = smul.u32 2, %s29
        %s437 = ssub.s32 3, %s436
        %p438 = scmp.lt.s32.totalorder %s437, 2
        %s439 = scalar_select %p438, %s437, 2
        %s440 = smul.u32 8, %s439
        %s441 = smul.u32 2, %s29
        %s442 = ssub.s32 3, %s441
        %p443 = scmp.lt.s32.totalorder %s442, 2
        %s444 = scalar_select %p443, %s442, 2
        %s445 = smul.u32 8, %s444
        %v446 = vld [vmem:[%s377] sm:$0xff]
        %v447 = vld [vmem:[%s377 + $0x8] sm:$0xff]
        %v448 = vxor.u32 %v446, 2147483648
        %v449 = vxor.u32 %v447, 2147483648
        %v450 = vmul.f32 %v448, 1.442695
        %v451 = vpow.pop %v450
        %v452 = vmul.f32 %v449, 1.442695
        %v453 = vpow.pop %v452
        %v454 = vadd.f32 %v451, 1.0
        %v455 = vadd.f32 %v453, 1.0
        %v456 = vrcp.pop %v454
        %v457 = vmul.f32 %v454, %v456
        %v458 = vsub.f32 1.0, %v457
        %v459 = vmul.f32 %v456, %v458
        %v460 = vadd.f32 %v456, %v459
        %vm461 = vweird.f32 %v454
        %vm462 = vweird.f32 %v456
        %vm463 = vmor %vm461, %vm462
        %v464 = vsel %vm463, %v456, %v460
        %v465 = vand.u32 2147483647, %v454
        %vm466 = vcmp.eq.f32.partialorder %v465, 8.507059e+37
        %v467 = vand.u32 %v454, 2147483648
        %v468 = vor.u32 1.1754944e-38, %v467
        %v469 = vsel %vm466, %v468, %v464
        %v470 = vmul.f32 1.0, %v469
        %v471 = vrcp.pop %v455
        %v472 = vmul.f32 %v455, %v471
        %v473 = vsub.f32 1.0, %v472
        %v474 = vmul.f32 %v471, %v473
        %v475 = vadd.f32 %v471, %v474
        %vm476 = vweird.f32 %v455
        %vm477 = vweird.f32 %v471
        %vm478 = vmor %vm476, %vm477
        %v479 = vsel %vm478, %v471, %v475
        %v480 = vand.u32 2147483647, %v455
        %vm481 = vcmp.eq.f32.partialorder %v480, 8.507059e+37
        %v482 = vand.u32 %v455, 2147483648
        %v483 = vor.u32 1.1754944e-38, %v482
        %v484 = vsel %vm481, %v483, %v479
        %v485 = vmul.f32 1.0, %v484
        %v486 = vmul.f32 %v446, %v470
        %v487 = vmul.f32 %v447, %v485
        %v488 = vld [vmem:[#allocation7] sm:$0xff]
        %v489 = vld [vmem:[#allocation7 + $0x8] sm:$0xff]
        %v490 = vld [vmem:[#allocation7 + $0x10] sm:$0xff]
        %v491 = vld [vmem:[#allocation7 + $0x18] sm:$0xff]
        %v492 = vld [vmem:[%s5] sm:$0x1]
        %v494 = vperm.slane %v492, 0
        %vm496 = vcmask 261120
        %v498 = vsel %vm496, %v486, 0
        %v501 = vsel %vm496, %v487, 0
        %503 = vmatpush.msra.mxu0 0.0
        %504 = vmatpush.msra.mxu0 0.0
        %505 = vmatpush.msra.mxu0 0.0
        %506 = vmatpush.msra.mxu0 0.0
        %507 = vmatpush.msra.mxu0 0.0
        %508 = vmatpush.msra.mxu0 0.0
        %509 = vmatpush.msra.mxu0 0.0
        %510 = vmatpush.msra.mxu0 0.0
        %511 = vmatpush.msra.mxu0 0.0
        %512 = vmatpush.msra.mxu0 0.0
        %513 = vmatpush.msra.mxu0 0.0
        %514 = vmatpush.msra.mxu0 0.0
        %515 = vmatpush.msra.mxu0 %v491
        %516 = vmatpush.msra.mxu0 %v490
        %517 = vmatpush.msra.mxu0 %v489
        %518 = vmatpush.msra.mxu0 %v488
        %519 = vmatmul.f32.gmra.mxu0 %v498
        %v520 = vpop.f32.mrf.mxu0
        %v521 = vadd.f32 %v494, %v520
        %522 = vmatmul.f32.gmra.mxu0 %v501
        %v523 = vpop.f32.mrf.mxu0
        %v524 = vadd.f32 %v494, %v523
        %525 = vdwg.mxu0
        %v526 = vld [vmem:[#allocation8] sm:$0xff]
        %v527 = vld [vmem:[#allocation8 + $0x8] sm:$0xff]
        %v528 = vld [vmem:[#allocation8 + $0x10] sm:$0xff]
        %v529 = vld [vmem:[#allocation8 + $0x18] sm:$0xff]
        %v530 = vld [vmem:[%s6] sm:$0x1]
        %v532 = vperm.slane %v530, 0
        %534 = vmatpush.msra.mxu0 0.0
        %535 = vmatpush.msra.mxu0 0.0
        %536 = vmatpush.msra.mxu0 0.0
        %537 = vmatpush.msra.mxu0 0.0
        %538 = vmatpush.msra.mxu0 0.0
        %539 = vmatpush.msra.mxu0 0.0
        %540 = vmatpush.msra.mxu0 0.0
        %541 = vmatpush.msra.mxu0 0.0
        %542 = vmatpush.msra.mxu0 0.0
        %543 = vmatpush.msra.mxu0 0.0
        %544 = vmatpush.msra.mxu0 0.0
        %545 = vmatpush.msra.mxu0 0.0
        %546 = vmatpush.msra.mxu0 %v529
        %547 = vmatpush.msra.mxu0 %v528
        %548 = vmatpush.msra.mxu0 %v527
        %549 = vmatpush.msra.mxu0 %v526
        %550 = vmatmul.f32.gmra.mxu0 %v498
        %v551 = vpop.f32.mrf.mxu0
        %v552 = vadd.f32 %v532, %v551
        %553 = vmatmul.f32.gmra.mxu0 %v501
        %v554 = vpop.f32.mrf.mxu0
        %v555 = vadd.f32 %v532, %v554
        %556 = vdwg.mxu0
        %v557 = vld [vmem:[%s367] sm:$0xff]
        %v558 = vld [vmem:[%s367 + $0x8] sm:$0xff]
        %v559 = vsel %vm496, %v557, 0.0
        %560 = vadd.xlane.f32.xlu0 %v559
        %v561 = vpop.xlane.xlu0 %560
        %v562 = vsel %vm496, %v558, 0.0
        %563 = vadd.xlane.f32.xlu0 %v562
        %v564 = vpop.xlane.xlu0 %563
        %v565 = vmul.f32 %v561, 0.03125
        %v566 = vmul.f32 %v564, 0.03125
        %v567 = vmul.f32 %v557, %v557
        %v568 = vmul.f32 %v558, %v558
        %v569 = vsel %vm496, %v567, 0.0
        %570 = vadd.xlane.f32.xlu0 %v569
        %v571 = vpop.xlane.xlu0 %570
        %v572 = vsel %vm496, %v568, 0.0
        %573 = vadd.xlane.f32.xlu0 %v572
        %v574 = vpop.xlane.xlu0 %573
        %v575 = vmul.f32 %v571, 0.03125
        %v576 = vmul.f32 %v574, 0.03125
        %v577 = vmul.f32 %v565, %v565
        %v578 = vmul.f32 %v566, %v566
        %v579 = vsub.f32 %v575, %v577
        %v580 = vsub.f32 %v576, %v578
        %v581 = vmax.f32 %v579, 0.0
        %v582 = vmax.f32 %v580, 0.0
        %v583 = vadd.f32 %v581, 1e-06
        %v584 = vadd.f32 %v582, 1e-06
        %v585 = vrsqrt.pop %v583
        %v586 = vmul.f32 %v585, %v583
        %v587 = vmul.f32 %v586, %v585
        %v588 = vmul.f32 0.5, %v587
        %v589 = vsub.f32 1.5, %v588
        %v590 = vmul.f32 %v585, %v589
        %vm591 = vweird.f32 %v583
        %vm592 = vweird.f32 %v585
        %vm593 = vmor %vm591, %vm592
        %v594 = vsel %vm593, %v585, %v590
        %v595 = vrsqrt.pop %v584
        %v596 = vmul.f32 %v595, %v584
        %v597 = vmul.f32 %v596, %v595
        %v598 = vmul.f32 0.5, %v597
        %v599 = vsub.f32 1.5, %v598
        %v600 = vmul.f32 %v595, %v599
        %vm601 = vweird.f32 %v584
        %vm602 = vweird.f32 %v595
        %vm603 = vmor %vm601, %vm602
        %v604 = vsel %vm603, %v595, %v600
        %v605 = vsub.f32 %v557, %v565
        %v606 = vsub.f32 %v558, %v566
        %v607 = vmul.f32 %v605, %v594
        %v608 = vmul.f32 %v606, %v604
        %v609 = vmul.f32 %v607, %v552
        %v610 = vmul.f32 %v608, %v555
        %v611 = vadd.f32 %v609, %v521
        %v612 = vadd.f32 %v610, %v524
        %v613 = vld [vmem:[#allocation10] sm:$0xff]
        %v614 = vld [vmem:[#allocation10 + $0x8] sm:$0xff]
        %v615 = vld [vmem:[#allocation10 + $0x10] sm:$0xff]
        %v616 = vld [vmem:[#allocation10 + $0x18] sm:$0xff]
        %v617 = vld [vmem:[%s7] sm:$0x1]
        %v619 = vperm.slane %v617, 0
        %v622 = vsel %vm496, %v611, 0
        %v625 = vsel %vm496, %v612, 0
        %627 = vmatpush.msra.mxu0 0.0
        %628 = vmatpush.msra.mxu0 0.0
        %629 = vmatpush.msra.mxu0 0.0
        %630 = vmatpush.msra.mxu0 0.0
        %631 = vmatpush.msra.mxu0 0.0
        %632 = vmatpush.msra.mxu0 0.0
        %633 = vmatpush.msra.mxu0 0.0
        %634 = vmatpush.msra.mxu0 0.0
        %635 = vmatpush.msra.mxu0 0.0
        %636 = vmatpush.msra.mxu0 0.0
        %637 = vmatpush.msra.mxu0 0.0
        %638 = vmatpush.msra.mxu0 0.0
        %639 = vmatpush.msra.mxu0 %v616
        %640 = vmatpush.msra.mxu0 %v615
        %641 = vmatpush.msra.mxu0 %v614
        %642 = vmatpush.msra.mxu0 %v613
        %643 = vmatmul.f32.gmra.mxu0 %v622
        %v644 = vpop.f32.mrf.mxu0
        %v645 = vadd.f32 %v619, %v644
        %646 = vmatmul.f32.gmra.mxu0 %v625
        %v647 = vpop.f32.mrf.mxu0
        %v648 = vadd.f32 %v619, %v647
        %649 = vdwg.mxu0
        %650 = vst [vmem:[%s430] sm:$0xff] %v645
        %651 = vst [vmem:[%s430 + $0x8] sm:$0xff] %v648
        %s652 = sand.u32 %s215, 1
        %s653 = scalar_lea.sflag [#allocation4], %s652
        %s654 = sand.u32 %s215, 1
        %s655 = smul.addr %s654, 16
        %s656 = scalar_lea.vmem [#allocation11], %s655
        // Predicated region
        $region73: #{tpu_custom_call.1} parent=51 // pred_check
          %p657 = pneg %p225
        $region74: #{tpu_custom_call.1} parent=51 // pred_check_branch
          %659 = sbr.rel (%p657) target = $region76
        $region75: #{tpu_custom_call.1} parent=51 // pred_region
          %s660 = smul.u32 2, %s29
          %s661 = ssub.s32 3, %s660
          %p662 = scmp.lt.s32.totalorder %s661, 2
          %s663 = scalar_select %p662, %s661, 2
          %s664 = smul.u32 8, %s663
          %s665 = ssub.s32 16, %s664
          %s666 = sshll.u32 %s665, 4
          %667 = vsyncadd %s653, %s666
          %p668 = scmp.ne.s32.totalorder 0, %s664
          %s669 = smul.addr %s660, 8
          %s670 = scalar_lea.hbm %s8, %s669
          %s671 = smul.u32 8, %s663
          %s672 = sshll.u32 %s656, 4
          %s673 = int_to_ptr.vmem [resolvable:$true] %s672
          %s674 = sshll.u32 %s670, 4
          %s675 = int_to_ptr.hbm [resolvable:$true] %s674
          %s676 = sshll.u32 %s671, 4
          %680 = dma.vmem_to_hbm [thread:$0]  (%p668), %s673, %s676, %s675, %s653, 128, 128, 8
        $region76: #{tpu_custom_call.1} parent=51 // pred_fallthru
          _
      $region52: #{tpu_custom_call.1} parent=5 // pred_fallthru
        _
      %p681 = scmp.le.s32.totalorder 2, %s24
      // Predicated region
      $region77: #{tpu_custom_call.1} parent=5 // pred_check
        %p682 = pneg %p681
      $region78: #{tpu_custom_call.1} parent=5 // pred_check_branch
        %684 = sbr.rel (%p682) target = $region80
      $region79: #{tpu_custom_call.1} parent=5 // pred_region
        %s685 = ssub.s32 %s24, 2
        // Predicated region
        $region81: #{tpu_custom_call.1} parent=79 // pred_check
          %p686 = pneg %p231
        $region82: #{tpu_custom_call.1} parent=79 // pred_check_branch
          %688 = sbr.rel (%p686) target = $region84
        $region83: #{tpu_custom_call.1} parent=79 // pred_region
          %s689 = sand.u32 %s216, 1
          %s690 = scalar_lea.sflag [#allocation4], %s689
          %s691 = sand.u32 %s216, 1
          %s692 = smul.addr %s691, 16
          %s693 = scalar_lea.vmem [#allocation11], %s692
          %695 = dma.done %s690, 256
        $region84: #{tpu_custom_call.1} parent=79 // pred_fallthru
          _
      $region80: #{tpu_custom_call.1} parent=5 // pred_fallthru
        _
    $region6: #{tpu_custom_call.1} parent=1 // loop_footer
      %s28 = sadd.s32 1, %s24
    $region7: #{tpu_custom_call.1} parent=1 // loop_footer_branch
      %23 = sbr.rel target = $region3
    $region8: #{tpu_custom_call.1} parent=1 // loop_exit
      _
    %696 = vsyncpa [#allocation3], 1
    %s697 = scalar_lea.sflag [#allocation3], 1
    %698 = vsyncpa %s697, 1
    %699 = vsyncpa [#allocation6], 1
    %s700 = scalar_lea.sflag [#allocation6], 1
    %701 = vsyncpa %s700, 1
    %702 = vsyncpa [#allocation9], 1
    %703 = vsyncpa [#allocation4], 1
    %s704 = scalar_lea.sflag [#allocation4], 1
    %705 = vsyncpa %s704, 1

// kernel: tpu_custom_call.1
$region0: #{tpu_custom_call.1}
  #allocation0 [shape = 'u32[]', space=smem, size = 0x4, offset = 0x4, fixed_abs, tag = 'smem constant byte address 0x4 - core index']
  #allocation1 [shape = 'u32[72,128]{1,0:T(1,128)}', space=vmem, size = 0x9000, scoped, tag = 'internal scratch']
  %s0 = inlined_call_operand.hbm [shape: f32[20,32], index: 0, kind: input, shape index: {}]
  %s1 = inlined_call_operand.hbm [shape: f32[20,32], index: 1, kind: input, shape index: {}]
  %s2 = inlined_call_operand.hbm [shape: f32[32,32], index: 2, kind: input, shape index: {}]
  %s3 = inlined_call_operand.hbm [shape: f32[32,32], index: 3, kind: input, shape index: {}]
  %s4 = inlined_call_operand.hbm [shape: f32[32,128], index: 4, kind: input, shape index: {}]
  %s5 = inlined_call_operand.vmem [shape: f32[1,32], index: 5, kind: input, shape index: {}]
  %s6 = inlined_call_operand.vmem [shape: f32[1,32], index: 6, kind: input, shape index: {}]
  %s7 = inlined_call_operand.vmem [shape: f32[1,128], index: 7, kind: input, shape index: {}]
  %s8 = inlined_call_operand.hbm [shape: f32[20,128], index: 8, kind: output, shape index: {}]
  %s9 = sld [smem:[#allocation0]]
  $region85: #{tpu_custom_call.1} parent=0
    _
  %s11 = ssub.s32 1, %s9
  %s12 = scalar_select 0, %s11, %s9
  $region1: #{tpu_custom_call.1} parent=0
    #allocation2 [shape = 'u8[16384]{0}', space=vmem, size = 0x4000, scoped, tag = 'input window, operand 0']
    #allocation3 [shape = 's32[2]{0}', space=sflag, size = 0x8, scoped, tag = 'scoped memory for tpu_custom_call.1']
    #allocation4 [shape = 's32[2]{0}', space=sflag, size = 0x8, scoped, tag = 'scoped memory for tpu_custom_call.1']
    #allocation5 [shape = 'u8[16384]{0}', space=vmem, size = 0x4000, scoped, tag = 'input window, operand 1']
    #allocation6 [shape = 's32[2]{0}', space=sflag, size = 0x8, scoped, tag = 'scoped memory for tpu_custom_call.1']
    #allocation7 [shape = 'u8[16384]{0}', space=vmem, size = 0x4000, scoped, tag = 'input window, operand 2, single buffered']
    #allocation8 [shape = 'u8[16384]{0}', space=vmem, size = 0x4000, scoped, tag = 'input window, operand 3, single buffered']
    #allocation9 [shape = 's32[1]{0}', space=sflag, size = 0x4, scoped, tag = 'scoped memory for tpu_custom_call.1']
    #allocation10 [shape = 'u8[16384]{0}', space=vmem, size = 0x4000, scoped, tag = 'input window, operand 4, single buffered']
    #allocation11 [shape = 'u8[16384]{0}', space=vmem, size = 0x4000, scoped, tag = 'output window, operand 0']
    %13 = vsyncpa [#allocation3], 0
    %s14 = scalar_lea.sflag [#allocation3], 1
    %15 = vsyncpa %s14, 0
    %16 = vsyncpa [#allocation6], 0
    %s17 = scalar_lea.sflag [#allocation6], 1
    %18 = vsyncpa %s17, 0
    %19 = vsyncpa [#allocation9], 0
    %20 = vsyncpa [#allocation4], 0
    %s21 = scalar_lea.sflag [#allocation4], 1
    %22 = vsyncpa %s21, 0
    loop: start=0, step=1, limit=4
    $region2: #{tpu_custom_call.1} parent=1 // loop_pre_header
      _
    $region3: #{tpu_custom_call.1} parent=1 // loop_header
      %s24 = sphi 0, %s28
      %p25 = scmp.ge.s32.totalorder %s24, 4
      %s34 = sphi 0, %s36
      %s37 = sphi 0, %s34
      %s38 = sphi 0, %s37
      %s54 = sphi 0, %s38
      %s60 = sphi 0, %s62
      %s63 = sphi 0, %s60
      %s64 = sphi 0, %s63
      %s80 = sphi 0, %s64
      %s84 = sphi 0, %s84
      %s86 = sphi 0, %s84
      %s87 = sphi 0, %s86
      %s101 = sphi 0, %s87
      %s105 = sphi 0, %s105
      %s107 = sphi 0, %s105
      %s108 = sphi 0, %s107
      %s122 = sphi 0, %s108
      %s126 = sphi 0, %s126
      %s128 = sphi 0, %s126
      %s129 = sphi 0, %s128
      %s143 = sphi 0, %s129
      %s147 = sphi 0, %s147
      %s149 = sphi 0, %s147
      %s150 = sphi 0, %s149
      %s164 = sphi 0, %s150
      %s168 = sphi 0, %s168
      %s170 = sphi 0, %s168
      %s171 = sphi 0, %s170
      %s185 = sphi 0, %s171
      %s189 = sphi 0, %s189
      %s191 = sphi 0, %s189
      %s192 = sphi 0, %s191
      %s206 = sphi 0, %s192
      %s212 = sphi 0, %s214
      %s215 = sphi 0, %s212
      %s216 = sphi 0, %s215
      %s232 = sphi 0, %s216
    $region4: #{tpu_custom_call.1} parent=1 // loop_header_branch
      %27 = sbr.rel (%p25) target = $region8
    $region5: #{tpu_custom_call.1} parent=1 // loop_body
      %s29 = ssub.s32 %s24, 1
      %s30 = ssub.s32 %s24, 2
      %s31 = sadd.s32 %s24, 1
      %s32 = ssub.s32 %s24, %s31
      %p33 = scmp.eq.s32.totalorder %s32, 0
      %s35 = sadd.s32 %s34, 1
      %s36 = scalar_select %p33, %s34, %s35
      %p39 = pneg %p33
      %p40 = scmp.eq.s32.totalorder %s24, 1
      %p41 = por %p39, %p40
      %p42 = scmp.ne.s32.totalorder %s34, %s37
      %p43 = scmp.eq.s32.totalorder %s24, 0
      %p44 = por %p42, %p43
      %p45 = scmp.ne.s32.totalorder %s34, %s37
      %p46 = scmp.eq.s32.totalorder %s29, 1
      %p47 = por %p45, %p46
      %p48 = scmp.ne.s32.totalorder %s37, %s38
      %p49 = scmp.eq.s32.totalorder %s29, 0
      %p50 = por %p48, %p49
      %p51 = scmp.ne.s32.totalorder %s37, %s38
      %p52 = scmp.eq.s32.totalorder %s30, 1
      %p53 = por %p51, %p52
      %p55 = scmp.ne.s32.totalorder %s38, %s54
      %p56 = scmp.eq.s32.totalorder %s30, 0
      %p57 = por %p55, %p56
      %s58 = ssub.s32 %s24, %s31
      %p59 = scmp.eq.s32.totalorder %s58, 0
      %s61 = sadd.s32 %s60, 1
      %s62 = scalar_select %p59, %s60, %s61
      %p65 = pneg %p59
      %p66 = scmp.eq.s32.totalorder %s24, 1
      %p67 = por %p65, %p66
      %p68 = scmp.ne.s32.totalorder %s60, %s63
      %p69 = scmp.eq.s32.totalorder %s24, 0
      %p70 = por %p68, %p69
      %p71 = scmp.ne.s32.totalorder %s60, %s63
      %p72 = scmp.eq.s32.totalorder %s29, 1
      %p73 = por %p71, %p72
      %p74 = scmp.ne.s32.totalorder %s63, %s64
      %p75 = scmp.eq.s32.totalorder %s29, 0
      %p76 = por %p74, %p75
      %p77 = scmp.ne.s32.totalorder %s63, %s64
      %p78 = scmp.eq.s32.totalorder %s30, 1
      %p79 = por %p77, %p78
      %p81 = scmp.ne.s32.totalorder %s64, %s80
      %p82 = scmp.eq.s32.totalorder %s30, 0
      %p83 = por %p81, %p82
      %s85 = sadd.s32 %s84, 1
      %p88 = scmp.eq.s32.totalorder %s24, 1
      %p89 = scmp.ne.s32.totalorder %s84, %s86
      %p90 = scmp.eq.s32.totalorder %s24, 0
      %p91 = por %p89, %p90
      %p92 = scmp.ne.s32.totalorder %s84, %s86
      %p93 = scmp.eq.s32.totalorder %s29, 1
      %p94 = por %p92, %p93
      %p95 = scmp.ne.s32.totalorder %s86, %s87
      %p96 = scmp.eq.s32.totalorder %s29, 0
      %p97 = por %p95, %p96
      %p98 = scmp.ne.s32.totalorder %s86, %s87
      %p99 = scmp.eq.s32.totalorder %s30, 1
      %p100 = por %p98, %p99
      %p102 = scmp.ne.s32.totalorder %s87, %s101
      %p103 = scmp.eq.s32.totalorder %s30, 0
      %p104 = por %p102, %p103
      %s106 = sadd.s32 %s105, 1
      %p109 = scmp.eq.s32.totalorder %s24, 1
      %p110 = scmp.ne.s32.totalorder %s105, %s107
      %p111 = scmp.eq.s32.totalorder %s24, 0
      %p112 = por %p110, %p111
      %p113 = scmp.ne.s32.totalorder %s105, %s107
      %p114 = scmp.eq.s32.totalorder %s29, 1
      %p115 = por %p113, %p114
      %p116 = scmp.ne.s32.totalorder %s107, %s108
      %p117 = scmp.eq.s32.totalorder %s29, 0
      %p118 = por %p116, %p117
      %p119 = scmp.ne.s32.totalorder %s107, %s108
      %p120 = scmp.eq.s32.totalorder %s30, 1
      %p121 = por %p119, %p120
      %p123 = scmp.ne.s32.totalorder %s108, %s122
      %p124 = scmp.eq.s32.totalorder %s30, 0
      %p125 = por %p123, %p124
      %s127 = sadd.s32 %s126, 1
      %p130 = scmp.eq.s32.totalorder %s24, 1
      %p131 = scmp.ne.s32.totalorder %s126, %s128
      %p132 = scmp.eq.s32.totalorder %s24, 0
      %p133 = por %p131, %p132
      %p134 = scmp.ne.s32.totalorder %s126, %s128
      %p135 = scmp.eq.s32.totalorder %s29, 1
      %p136 = por %p134, %p135
      %p137 = scmp.ne.s32.totalorder %s128, %s129
      %p138 = scmp.eq.s32.totalorder %s29, 0
      %p139 = por %p137, %p138
      %p140 = scmp.ne.s32.totalorder %s128, %s129
      %p141 = scmp.eq.s32.totalorder %s30, 1
      %p142 = por %p140, %p141
      %p144 = scmp.ne.s32.totalorder %s129, %s143
      %p145 = scmp.eq.s32.totalorder %s30, 0
      %p146 = por %p144, %p145
      %s148 = sadd.s32 %s147, 1
      %p151 = scmp.eq.s32.totalorder %s24, 1
      %p152 = scmp.ne.s32.totalorder %s147, %s149
      %p153 = scmp.eq.s32.totalorder %s24, 0
      %p154 = por %p152, %p153
      %p155 = scmp.ne.s32.totalorder %s147, %s149
      %p156 = scmp.eq.s32.totalorder %s29, 1
      %p157 = por %p155, %p156
      %p158 = scmp.ne.s32.totalorder %s149, %s150
      %p159 = scmp.eq.s32.totalorder %s29, 0
      %p160 = por %p158, %p159
      %p161 = scmp.ne.s32.totalorder %s149, %s150
      %p162 = scmp.eq.s32.totalorder %s30, 1
      %p163 = por %p161, %p162
      %p165 = scmp.ne.s32.totalorder %s150, %s164
      %p166 = scmp.eq.s32.totalorder %s30, 0
      %p167 = por %p165, %p166
      %s169 = sadd.s32 %s168, 1
      %p172 = scmp.eq.s32.totalorder %s24, 1
      %p173 = scmp.ne.s32.totalorder %s168, %s170
      %p174 = scmp.eq.s32.totalorder %s24, 0
      %p175 = por %p173, %p174
      %p176 = scmp.ne.s32.totalorder %s168, %s170
      %p177 = scmp.eq.s32.totalorder %s29, 1
      %p178 = por %p176, %p177
      %p179 = scmp.ne.s32.totalorder %s170, %s171
      %p180 = scmp.eq.s32.totalorder %s29, 0
      %p181 = por %p179, %p180
      %p182 = scmp.ne.s32.totalorder %s170, %s171
      %p183 = scmp.eq.s32.totalorder %s30, 1
      %p184 = por %p182, %p183
      %p186 = scmp.ne.s32.totalorder %s171, %s185
      %p187 = scmp.eq.s32.totalorder %s30, 0
      %p188 = por %p186, %p187
      %s190 = sadd.s32 %s189, 1
      %p193 = scmp.eq.s32.totalorder %s24, 1
      %p194 = scmp.ne.s32.totalorder %s189, %s191
      %p195 = scmp.eq.s32.totalorder %s24, 0
      %p196 = por %p194, %p195
      %p197 = scmp.ne.s32.totalorder %s189, %s191
      %p198 = scmp.eq.s32.totalorder %s29, 1
      %p199 = por %p197, %p198
      %p200 = scmp.ne.s32.totalorder %s191, %s192
      %p201 = scmp.eq.s32.totalorder %s29, 0
      %p202 = por %p200, %p201
      %p203 = scmp.ne.s32.totalorder %s191, %s192
      %p204 = scmp.eq.s32.totalorder %s30, 1
      %p205 = por %p203, %p204
      %p207 = scmp.ne.s32.totalorder %s192, %s206
      %p208 = scmp.eq.s32.totalorder %s30, 0
      %p209 = por %p207, %p208
      %s210 = ssub.s32 %s24, %s31
      %p211 = scmp.eq.s32.totalorder %s210, 0
      %s213 = sadd.s32 %s212, 1
      %s214 = scalar_select %p211, %s212, %s213
      %p217 = pneg %p211
      %p218 = scmp.eq.s32.totalorder %s24, 1
      %p219 = por %p217, %p218
      %p220 = scmp.ne.s32.totalorder %s212, %s215
      %p221 = scmp.eq.s32.totalorder %s24, 0
      %p222 = por %p220, %p221
      %p223 = scmp.ne.s32.totalorder %s212, %s215
      %p224 = scmp.eq.s32.totalorder %s29, 1
      %p225 = por %p223, %p224
      %p226 = scmp.ne.s32.totalorder %s215, %s216
      %p227 = scmp.eq.s32.totalorder %s29, 0
      %p228 = por %p226, %p227
      %p229 = scmp.ne.s32.totalorder %s215, %s216
      %p230 = scmp.eq.s32.totalorder %s30, 1
      %p231 = por %p229, %p230
      %p233 = scmp.ne.s32.totalorder %s216, %s232
      %p234 = scmp.eq.s32.totalorder %s30, 0
      %p235 = por %p233, %p234
      %p236 = scmp.le.s32.totalorder 1, %s24
      %p237 = scmp.lt.s32.totalorder %s24, 3
      %p238 = pnand %p236, %p237
      %p239 = pneg %p238
      // Predicated region
      $region9: #{tpu_custom_call.1} parent=5 // pred_check
        _
      $region10: #{tpu_custom_call.1} parent=5 // pred_check_branch
        %241 = sbr.rel (%p238) target = $region12
      $region11: #{tpu_custom_call.1} parent=5 // pred_region
        %s242 = ssub.s32 %s24, 1
        // Predicated region
        $region13: #{tpu_custom_call.1} parent=11 // pred_check
          %p243 = pneg %p97
        $region14: #{tpu_custom_call.1} parent=11 // pred_check_branch
          %245 = sbr.rel (%p243) target = $region16
        $region15: #{tpu_custom_call.1} parent=11 // pred_region
          %247 = vsyncadd [#allocation6], 0
          %s248 = sshll.u32 %s2, 4
          %s249 = int_to_ptr.hbm [resolvable:$true] %s248
          %s250 = sshll.u32 [#allocation7], 4
          %s251 = int_to_ptr.vmem [resolvable:$true] %s250
          %256 = dma.hbm_to_vmem [thread:$0]  %s249, 512, %s251, [#allocation6], 128, 128, 8
        $region16: #{tpu_custom_call.1} parent=11 // pred_fallthru
          _
        // Predicated region
        $region17: #{tpu_custom_call.1} parent=11 // pred_check
          %p257 = pneg %p118
        $region18: #{tpu_custom_call.1} parent=11 // pred_check_branch
          %259 = sbr.rel (%p257) target = $region20
        $region19: #{tpu_custom_call.1} parent=11 // pred_region
          %261 = vsyncadd [#allocation9], 0
          %s262 = sshll.u32 %s3, 4
          %s263 = int_to_ptr.hbm [resolvable:$true] %s262
          %s264 = sshll.u32 [#allocation8], 4
          %s265 = int_to_ptr.vmem [resolvable:$true] %s264
          %270 = dma.hbm_to_vmem [thread:$0]  %s263, 512, %s265, [#allocation9], 128, 128, 8
        $region20: #{tpu_custom_call.1} parent=11 // pred_fallthru
          _
        // Predicated region
        $region21: #{tpu_custom_call.1} parent=11 // pred_check
          %p271 = pneg %p139
        $region22: #{tpu_custom_call.1} parent=11 // pred_check_branch
          %273 = sbr.rel (%p271) target = $region24
        $region23: #{tpu_custom_call.1} parent=11 // pred_region
          %275 = vsyncadd [#allocation9], 0
          %s276 = sshll.u32 %s4, 4
          %s277 = int_to_ptr.hbm [resolvable:$true] %s276
          %s278 = sshll.u32 [#allocation10], 4
          %s279 = int_to_ptr.vmem [resolvable:$true] %s278
          %284 = dma.hbm_to_vmem [thread:$0]  %s277, 512, %s279, [#allocation9], 128, 128, 8
        $region24: #{tpu_custom_call.1} parent=11 // pred_fallthru
          _
        // Predicated region
        $region25: #{tpu_custom_call.1} parent=11 // pred_check
          %p285 = pneg %p160
        $region26: #{tpu_custom_call.1} parent=11 // pred_check_branch
          %287 = sbr.rel (%p285) target = $region28
        $region27: #{tpu_custom_call.1} parent=11 // pred_region
          _
        $region28: #{tpu_custom_call.1} parent=11 // pred_fallthru
          _
        // Predicated region
        $region29: #{tpu_custom_call.1} parent=11 // pred_check
          %p288 = pneg %p181
        $region30: #{tpu_custom_call.1} parent=11 // pred_check_branch
          %290 = sbr.rel (%p288) target = $region32
        $region31: #{tpu_custom_call.1} parent=11 // pred_region
          _
        $region32: #{tpu_custom_call.1} parent=11 // pred_fallthru
          _
        // Predicated region
        $region33: #{tpu_custom_call.1} parent=11 // pred_check
          %p291 = pneg %p202
        $region34: #{tpu_custom_call.1} parent=11 // pred_check_branch
          %293 = sbr.rel (%p291) target = $region36
        $region35: #{tpu_custom_call.1} parent=11 // pred_region
          _
        $region36: #{tpu_custom_call.1} parent=11 // pred_fallthru
          _
      $region12: #{tpu_custom_call.1} parent=5 // pred_fallthru
        _
      %p294 = scmp.lt.s32.totalorder %s24, 2
      // Predicated region
      $region37: #{tpu_custom_call.1} parent=5 // pred_check
        %p295 = pneg %p294
      $region38: #{tpu_custom_call.1} parent=5 // pred_check_branch
        %297 = sbr.rel (%p295) target = $region40
      $region39: #{tpu_custom_call.1} parent=5 // pred_region
        // Predicated region
        $region41: #{tpu_custom_call.1} parent=39 // pred_check
          %p298 = pneg %p44
        $region42: #{tpu_custom_call.1} parent=39 // pred_check_branch
          %300 = sbr.rel (%p298) target = $region44
        $region43: #{tpu_custom_call.1} parent=39 // pred_region
          %s301 = sand.u32 %s34, 1
          %s302 = scalar_lea.sflag [#allocation3], %s301
          %s303 = sand.u32 %s34, 1
          %s304 = smul.addr %s303, 16
          %s305 = scalar_lea.vmem [#allocation2], %s304
          %s306 = smul.u32 2, %s24
          %s307 = ssub.s32 3, %s306
          %p308 = scmp.lt.s32.totalorder %s307, 2
          %s309 = scalar_select %p308, %s307, 2
          %s310 = smul.u32 8, %s309
          %s311 = ssub.s32 16, %s310
          %s312 = sshll.u32 %s311, 4
          %313 = vsyncadd %s302, %s312
          %p314 = scmp.ne.s32.totalorder 0, %s310
          %s315 = smul.addr %s306, 8
          %s316 = scalar_lea.hbm %s0, %s315
          %s317 = smul.u32 8, %s309
          %s318 = sshll.u32 %s316, 4
          %s319 = int_to_ptr.hbm [resolvable:$true] %s318
          %s320 = sshll.u32 %s305, 4
          %s321 = int_to_ptr.vmem [resolvable:$true] %s320
          %s322 = sshll.u32 %s317, 4
          %326 = dma.hbm_to_vmem [thread:$0]  (%p314), %s319, %s322, %s321, %s302, 128, 128, 8
        $region44: #{tpu_custom_call.1} parent=39 // pred_fallthru
          _
        // Predicated region
        $region45: #{tpu_custom_call.1} parent=39 // pred_check
          %p327 = pneg %p70
        $region46: #{tpu_custom_call.1} parent=39 // pred_check_branch
          %329 = sbr.rel (%p327) target = $region48
        $region47: #{tpu_custom_call.1} parent=39 // pred_region
          %s330 = sand.u32 %s24, 1
          %s331 = scalar_lea.sflag [#allocation6], %s330
          %s332 = sand.u32 %s60, 1
          %s333 = smul.addr %s332, 16
          %s334 = scalar_lea.vmem [#allocation5], %s333
          %s335 = smul.u32 2, %s24
          %s336 = ssub.s32 3, %s335
          %p337 = scmp.lt.s32.totalorder %s336, 2
          %s338 = scalar_select %p337, %s336, 2
          %s339 = smul.u32 8, %s338
          %s340 = ssub.s32 16, %s339
          %s341 = sshll.u32 %s340, 4
          %342 = vsyncadd %s331, %s341
          %p343 = scmp.ne.s32.totalorder 0, %s339
          %s344 = smul.addr %s335, 8
          %s345 = scalar_lea.hbm %s1, %s344
          %s346 = smul.u32 8, %s338
          %s347 = sshll.u32 %s345, 4
          %s348 = int_to_ptr.hbm [resolvable:$true] %s347
          %s349 = sshll.u32 %s334, 4
          %s350 = int_to_ptr.vmem [resolvable:$true] %s349
          %s351 = sshll.u32 %s346, 4
          %355 = dma.hbm_to_vmem [thread:$0]  (%p343), %s348, %s351, %s350, %s331, 128, 128, 8
        $region48: #{tpu_custom_call.1} parent=39 // pred_fallthru
          _
      $region40: #{tpu_custom_call.1} parent=5 // pred_fallthru
        _
      %p356 = scmp.le.s32.totalorder 1, %s24
      %p357 = scmp.lt.s32.totalorder %s24, 3
      %p358 = pnand %p356, %p357
      %p359 = pneg %p358
      // Predicated region
      $region49: #{tpu_custom_call.1} parent=5 // pred_check
        _
      $region50: #{tpu_custom_call.1} parent=5 // pred_check_branch
        %361 = sbr.rel (%p358) target = $region52
      $region51: #{tpu_custom_call.1} parent=5 // pred_region
        %s362 = ssub.s32 %s24, 1
        %s363 = sand.u32 %s37, 1
        %s364 = scalar_lea.sflag [#allocation3], %s363
        %s365 = sand.u32 %s37, 1
        %s366 = smul.addr %s365, 16
        %s367 = scalar_lea.vmem [#allocation2], %s366
        // Predicated region
        $region53: #{tpu_custom_call.1} parent=51 // pred_check
          %p368 = pneg %p50
        $region54: #{tpu_custom_call.1} parent=51 // pred_check_branch
          %370 = sbr.rel (%p368) target = $region56
        $region55: #{tpu_custom_call.1} parent=51 // pred_region
          %372 = dma.done %s364, 256
        $region56: #{tpu_custom_call.1} parent=51 // pred_fallthru
          _
        %s373 = sand.u32 %s29, 1
        %s374 = scalar_lea.sflag [#allocation6], %s373
        %s375 = sand.u32 %s63, 1
        %s376 = smul.addr %s375, 16
        %s377 = scalar_lea.vmem [#allocation5], %s376
        // Predicated region
        $region57: #{tpu_custom_call.1} parent=51 // pred_check
          %p378 = pneg %p76
        $region58: #{tpu_custom_call.1} parent=51 // pred_check_branch
          %380 = sbr.rel (%p378) target = $region60
        $region59: #{tpu_custom_call.1} parent=51 // pred_region
          %382 = dma.done %s374, 256
        $region60: #{tpu_custom_call.1} parent=51 // pred_fallthru
          _
        // Predicated region
        $region61: #{tpu_custom_call.1} parent=51 // pred_check
          %p383 = pneg %p97
        $region62: #{tpu_custom_call.1} parent=51 // pred_check_branch
          %385 = sbr.rel (%p383) target = $region64
        $region63: #{tpu_custom_call.1} parent=51 // pred_region
          %387 = dma.done [#allocation6], 512
        $region64: #{tpu_custom_call.1} parent=51 // pred_fallthru
          _
        // Predicated region
        $region65: #{tpu_custom_call.1} parent=51 // pred_check
          %p388 = pneg %p118
        $region66: #{tpu_custom_call.1} parent=51 // pred_check_branch
          %390 = sbr.rel (%p388) target = $region68
        $region67: #{tpu_custom_call.1} parent=51 // pred_region
          %392 = dma.done [#allocation9], 512
        $region68: #{tpu_custom_call.1} parent=51 // pred_fallthru
          _
        // Predicated region
        $region69: #{tpu_custom_call.1} parent=51 // pred_check
          %p393 = pneg %p139
        $region70: #{tpu_custom_call.1} parent=51 // pred_check_branch
          %395 = sbr.rel (%p393) target = $region72
        $region71: #{tpu_custom_call.1} parent=51 // pred_region
          %397 = dma.done [#allocation9], 512
        $region72: #{tpu_custom_call.1} parent=51 // pred_fallthru
          _
        %s398 = sand.u32 %s37, 1
        %s399 = scalar_lea.sflag [#allocation3], %s398
        %s400 = sand.u32 %s37, 1
        %s401 = smul.addr %s400, 16
        %s402 = scalar_lea.vmem [#allocation2], %s401
        %p403 = pneg %p50
        %p404 = pneg %p47
        %s405 = sand.u32 %s29, 1
        %s406 = scalar_lea.sflag [#allocation6], %s405
        %s407 = sand.u32 %s63, 1
        %s408 = smul.addr %s407, 16
        %s409 = scalar_lea.vmem [#allocation5], %s408
        %p410 = pneg %p76
        %p411 = pneg %p73
        %p412 = pneg %p97
        %p413 = pneg %p94
        %p414 = pneg %p118
        %p415 = pneg %p115
        %p416 = pneg %p139
        %p417 = pneg %p136
        %p418 = pneg %p160
        %p419 = pneg %p157
        %p420 = pneg %p181
        %p421 = pneg %p178
        %p422 = pneg %p202
        %p423 = pneg %p199
        %p424 = pneg %p228
        %p425 = pneg %p225
        %s426 = sand.u32 %s215, 1
        %s427 = scalar_lea.sflag [#allocation4], %s426
        %s428 = sand.u32 %s215, 1
        %s429 = smul.addr %s428, 16
        %s430 = scalar_lea.vmem [#allocation11], %s429
        %s431 = smul.u32 2, %s29
        %s432 = ssub.s32 3, %s431
        %p433 = scmp.lt.s32.totalorder %s432, 2
        %s434 = scalar_select %p433, %s432, 2
        %s435 = smul.u32 8, %s434
        %s436 = smul.u32 2, %s29
        %s437 = ssub.s32 3, %s436
        %p438 = scmp.lt.s32.totalorder %s437, 2
        %s439 = scalar_select %p438, %s437, 2
        %s440 = smul.u32 8, %s439
        %s441 = smul.u32 2, %s29
        %s442 = ssub.s32 3, %s441
        %p443 = scmp.lt.s32.totalorder %s442, 2
        %s444 = scalar_select %p443, %s442, 2
        %s445 = smul.u32 8, %s444
        %v446 = vld [vmem:[%s377] sm:$0xff]
        %v447 = vld [vmem:[%s377 + $0x8] sm:$0xff]
        %v448 = vxor.u32 %v446, 2147483648
        %v449 = vxor.u32 %v447, 2147483648
        %v450 = vmul.f32 %v448, 1.442695
        %v451 = vpow.pop %v450
        %v452 = vmul.f32 %v449, 1.442695
        %v453 = vpow.pop %v452
        %v454 = vadd.f32 %v451, 1.0
        %v455 = vadd.f32 %v453, 1.0
        %v456 = vrcp.pop %v454
        %v457 = vmul.f32 %v454, %v456
        %v458 = vsub.f32 1.0, %v457
        %v459 = vmul.f32 %v456, %v458
        %v460 = vadd.f32 %v456, %v459
        %vm461 = vweird.f32 %v454
        %vm462 = vweird.f32 %v456
        %vm463 = vmor %vm461, %vm462
        %v464 = vsel %vm463, %v456, %v460
        %v465 = vand.u32 2147483647, %v454
        %vm466 = vcmp.eq.f32.partialorder %v465, 8.507059e+37
        %v467 = vand.u32 %v454, 2147483648
        %v468 = vor.u32 1.1754944e-38, %v467
        %v469 = vsel %vm466, %v468, %v464
        %v470 = vmul.f32 1.0, %v469
        %v471 = vrcp.pop %v455
        %v472 = vmul.f32 %v455, %v471
        %v473 = vsub.f32 1.0, %v472
        %v474 = vmul.f32 %v471, %v473
        %v475 = vadd.f32 %v471, %v474
        %vm476 = vweird.f32 %v455
        %vm477 = vweird.f32 %v471
        %vm478 = vmor %vm476, %vm477
        %v479 = vsel %vm478, %v471, %v475
        %v480 = vand.u32 2147483647, %v455
        %vm481 = vcmp.eq.f32.partialorder %v480, 8.507059e+37
        %v482 = vand.u32 %v455, 2147483648
        %v483 = vor.u32 1.1754944e-38, %v482
        %v484 = vsel %vm481, %v483, %v479
        %v485 = vmul.f32 1.0, %v484
        %v486 = vmul.f32 %v446, %v470
        %v487 = vmul.f32 %v447, %v485
        %v488 = vld [vmem:[#allocation7] sm:$0xff]
        %v489 = vld [vmem:[#allocation7 + $0x8] sm:$0xff]
        %v490 = vld [vmem:[#allocation7 + $0x10] sm:$0xff]
        %v491 = vld [vmem:[#allocation7 + $0x18] sm:$0xff]
        %v492 = vld [vmem:[%s5] sm:$0x1]
        %v494 = vperm.slane %v492, 0
        %vm496 = vcmask 261120
        %v498 = vsel %vm496, %v486, 0
        %v501 = vsel %vm496, %v487, 0
        %503 = vmatpush.msra.mxu0 0.0
        %504 = vmatpush.msra.mxu0 0.0
        %505 = vmatpush.msra.mxu0 0.0
        %506 = vmatpush.msra.mxu0 0.0
        %507 = vmatpush.msra.mxu0 0.0
        %508 = vmatpush.msra.mxu0 0.0
        %509 = vmatpush.msra.mxu0 0.0
        %510 = vmatpush.msra.mxu0 0.0
        %511 = vmatpush.msra.mxu0 0.0
        %512 = vmatpush.msra.mxu0 0.0
        %513 = vmatpush.msra.mxu0 0.0
        %514 = vmatpush.msra.mxu0 0.0
        %515 = vmatpush.msra.mxu0 %v491
        %516 = vmatpush.msra.mxu0 %v490
        %517 = vmatpush.msra.mxu0 %v489
        %518 = vmatpush.msra.mxu0 %v488
        %519 = vmatmul.f32.gmra.mxu0 %v498
        %v520 = vpop.f32.mrf.mxu0
        %v521 = vadd.f32 %v494, %v520
        %522 = vmatmul.f32.gmra.mxu0 %v501
        %v523 = vpop.f32.mrf.mxu0
        %v524 = vadd.f32 %v494, %v523
        %525 = vdwg.mxu0
        %v526 = vld [vmem:[#allocation8] sm:$0xff]
        %v527 = vld [vmem:[#allocation8 + $0x8] sm:$0xff]
        %v528 = vld [vmem:[#allocation8 + $0x10] sm:$0xff]
        %v529 = vld [vmem:[#allocation8 + $0x18] sm:$0xff]
        %v530 = vld [vmem:[%s6] sm:$0x1]
        %v532 = vperm.slane %v530, 0
        %534 = vmatpush.msra.mxu0 0.0
        %535 = vmatpush.msra.mxu0 0.0
        %536 = vmatpush.msra.mxu0 0.0
        %537 = vmatpush.msra.mxu0 0.0
        %538 = vmatpush.msra.mxu0 0.0
        %539 = vmatpush.msra.mxu0 0.0
        %540 = vmatpush.msra.mxu0 0.0
        %541 = vmatpush.msra.mxu0 0.0
        %542 = vmatpush.msra.mxu0 0.0
        %543 = vmatpush.msra.mxu0 0.0
        %544 = vmatpush.msra.mxu0 0.0
        %545 = vmatpush.msra.mxu0 0.0
        %546 = vmatpush.msra.mxu0 %v529
        %547 = vmatpush.msra.mxu0 %v528
        %548 = vmatpush.msra.mxu0 %v527
        %549 = vmatpush.msra.mxu0 %v526
        %550 = vmatmul.f32.gmra.mxu0 %v498
        %v551 = vpop.f32.mrf.mxu0
        %v552 = vadd.f32 %v532, %v551
        %553 = vmatmul.f32.gmra.mxu0 %v501
        %v554 = vpop.f32.mrf.mxu0
        %v555 = vadd.f32 %v532, %v554
        %556 = vdwg.mxu0
        %v557 = vld [vmem:[%s367] sm:$0xff]
        %v558 = vld [vmem:[%s367 + $0x8] sm:$0xff]
        %v559 = vsel %vm496, %v557, 0.0
        %560 = vadd.xlane.f32.xlu0 %v559
        %v561 = vpop.xlane.xlu0 %560
        %v562 = vsel %vm496, %v558, 0.0
        %563 = vadd.xlane.f32.xlu0 %v562
        %v564 = vpop.xlane.xlu0 %563
        %v565 = vmul.f32 %v561, 0.03125
        %v566 = vmul.f32 %v564, 0.03125
        %v567 = vmul.f32 %v557, %v557
        %v568 = vmul.f32 %v558, %v558
        %v569 = vsel %vm496, %v567, 0.0
        %570 = vadd.xlane.f32.xlu0 %v569
        %v571 = vpop.xlane.xlu0 %570
        %v572 = vsel %vm496, %v568, 0.0
        %573 = vadd.xlane.f32.xlu0 %v572
        %v574 = vpop.xlane.xlu0 %573
        %v575 = vmul.f32 %v571, 0.03125
        %v576 = vmul.f32 %v574, 0.03125
        %v577 = vmul.f32 %v565, %v565
        %v578 = vmul.f32 %v566, %v566
        %v579 = vsub.f32 %v575, %v577
        %v580 = vsub.f32 %v576, %v578
        %v581 = vmax.f32 %v579, 0.0
        %v582 = vmax.f32 %v580, 0.0
        %v583 = vadd.f32 %v581, 1e-06
        %v584 = vadd.f32 %v582, 1e-06
        %v585 = vrsqrt.pop %v583
        %v586 = vmul.f32 %v585, %v583
        %v587 = vmul.f32 %v586, %v585
        %v588 = vmul.f32 0.5, %v587
        %v589 = vsub.f32 1.5, %v588
        %v590 = vmul.f32 %v585, %v589
        %vm591 = vweird.f32 %v583
        %vm592 = vweird.f32 %v585
        %vm593 = vmor %vm591, %vm592
        %v594 = vsel %vm593, %v585, %v590
        %v595 = vrsqrt.pop %v584
        %v596 = vmul.f32 %v595, %v584
        %v597 = vmul.f32 %v596, %v595
        %v598 = vmul.f32 0.5, %v597
        %v599 = vsub.f32 1.5, %v598
        %v600 = vmul.f32 %v595, %v599
        %vm601 = vweird.f32 %v584
        %vm602 = vweird.f32 %v595
        %vm603 = vmor %vm601, %vm602
        %v604 = vsel %vm603, %v595, %v600
        %v605 = vsub.f32 %v557, %v565
        %v606 = vsub.f32 %v558, %v566
        %v607 = vmul.f32 %v605, %v594
        %v608 = vmul.f32 %v606, %v604
        %v609 = vmul.f32 %v607, %v552
        %v610 = vmul.f32 %v608, %v555
        %v611 = vadd.f32 %v609, %v521
        %v612 = vadd.f32 %v610, %v524
        %v613 = vld [vmem:[#allocation10] sm:$0xff]
        %v614 = vld [vmem:[#allocation10 + $0x8] sm:$0xff]
        %v615 = vld [vmem:[#allocation10 + $0x10] sm:$0xff]
        %v616 = vld [vmem:[#allocation10 + $0x18] sm:$0xff]
        %v617 = vld [vmem:[%s7] sm:$0x1]
        %v619 = vperm.slane %v617, 0
        %v622 = vsel %vm496, %v611, 0
        %v625 = vsel %vm496, %v612, 0
        %627 = vmatpush.msra.mxu0 0.0
        %628 = vmatpush.msra.mxu0 0.0
        %629 = vmatpush.msra.mxu0 0.0
        %630 = vmatpush.msra.mxu0 0.0
        %631 = vmatpush.msra.mxu0 0.0
        %632 = vmatpush.msra.mxu0 0.0
        %633 = vmatpush.msra.mxu0 0.0
        %634 = vmatpush.msra.mxu0 0.0
        %635 = vmatpush.msra.mxu0 0.0
        %636 = vmatpush.msra.mxu0 0.0
        %637 = vmatpush.msra.mxu0 0.0
        %638 = vmatpush.msra.mxu0 0.0
        %639 = vmatpush.msra.mxu0 %v616
        %640 = vmatpush.msra.mxu0 %v615
        %641 = vmatpush.msra.mxu0 %v614
        %642 = vmatpush.msra.mxu0 %v613
        %643 = vmatmul.f32.gmra.mxu0 %v622
        %v644 = vpop.f32.mrf.mxu0
        %v645 = vadd.f32 %v619, %v644
        %646 = vmatmul.f32.gmra.mxu0 %v625
        %v647 = vpop.f32.mrf.mxu0
        %v648 = vadd.f32 %v619, %v647
        %649 = vdwg.mxu0
        %650 = vst [vmem:[%s430] sm:$0xff] %v645
        %651 = vst [vmem:[%s430 + $0x8] sm:$0xff] %v648
        %s652 = sand.u32 %s215, 1
        %s653 = scalar_lea.sflag [#allocation4], %s652
        %s654 = sand.u32 %s215, 1
        %s655 = smul.addr %s654, 16
        %s656 = scalar_lea.vmem [#allocation11], %s655
        // Predicated region
        $region73: #{tpu_custom_call.1} parent=51 // pred_check
          %p657 = pneg %p225
        $region74: #{tpu_custom_call.1} parent=51 // pred_check_branch
          %659 = sbr.rel (%p657) target = $region76
        $region75: #{tpu_custom_call.1} parent=51 // pred_region
          %s660 = smul.u32 2, %s29
          %s661 = ssub.s32 3, %s660
          %p662 = scmp.lt.s32.totalorder %s661, 2
          %s663 = scalar_select %p662, %s661, 2
          %s664 = smul.u32 8, %s663
          %s665 = ssub.s32 16, %s664
          %s666 = sshll.u32 %s665, 4
          %667 = vsyncadd %s653, %s666
          %p668 = scmp.ne.s32.totalorder 0, %s664
          %s669 = smul.addr %s660, 8
          %s670 = scalar_lea.hbm %s8, %s669
          %s671 = smul.u32 8, %s663
          %s672 = sshll.u32 %s656, 4
          %s673 = int_to_ptr.vmem [resolvable:$true] %s672
          %s674 = sshll.u32 %s670, 4
          %s675 = int_to_ptr.hbm [resolvable:$true] %s674
          %s676 = sshll.u32 %s671, 4
          %680 = dma.vmem_to_hbm [thread:$0]  (%p668), %s673, %s676, %s675, %s653, 128, 128, 8
        $region76: #{tpu_custom_call.1} parent=51 // pred_fallthru
          _
      $region52: #{tpu_custom_call.1} parent=5 // pred_fallthru
        _
      %p681 = scmp.le.s32.totalorder 2, %s24
      // Predicated region
      $region77: #{tpu_custom_call.1} parent=5 // pred_check
        %p682 = pneg %p681
      $region78: #{tpu_custom_call.1} parent=5 // pred_check_branch
        %684 = sbr.rel (%p682) target = $region80
      $region79: #{tpu_custom_call.1} parent=5 // pred_region
        %s685 = ssub.s32 %s24, 2
        // Predicated region
        $region81: #{tpu_custom_call.1} parent=79 // pred_check
          %p686 = pneg %p231
        $region82: #{tpu_custom_call.1} parent=79 // pred_check_branch
          %688 = sbr.rel (%p686) target = $region84
        $region83: #{tpu_custom_call.1} parent=79 // pred_region
          %s689 = sand.u32 %s216, 1
          %s690 = scalar_lea.sflag [#allocation4], %s689
          %s691 = sand.u32 %s216, 1
          %s692 = smul.addr %s691, 16
          %s693 = scalar_lea.vmem [#allocation11], %s692
          %695 = dma.done %s690, 256
        $region84: #{tpu_custom_call.1} parent=79 // pred_fallthru
          _
      $region80: #{tpu_custom_call.1} parent=5 // pred_fallthru
        _
    $region6: #{tpu_custom_call.1} parent=1 // loop_footer
      %s28 = sadd.s32 1, %s24
    $region7: #{tpu_custom_call.1} parent=1 // loop_footer_branch
      %23 = sbr.rel target = $region3
    $region8: #{tpu_custom_call.1} parent=1 // loop_exit
      _
    %696 = vsyncpa [#allocation3], 1
    %s697 = scalar_lea.sflag [#allocation3], 1
    %698 = vsyncpa %s697, 1
    %699 = vsyncpa [#allocation6], 1
    %s700 = scalar_lea.sflag [#allocation6], 1
    %701 = vsyncpa %s700, 1
    %702 = vsyncpa [#allocation9], 1
    %703 = vsyncpa [#allocation4], 1
    %s704 = scalar_lea.sflag [#allocation4], 1
    %705 = vsyncpa %s704, 1

</llo_original>
